<compile_context>
chip_gen: v5e
topology: v5e:2x2
jax: 0.10.0
libtpu: 0.0.40
codegen_flags: <defaults>
</compile_context>

<pallas_src>
import functools

import jax
import jax.numpy as jnp
from jax.experimental import pallas as pl
from jax.experimental.pallas import tpu as pltpu

KH = KW = 3  # 3x3 conv, stride 1, padding 1


def _vmem_cap_bytes():
    # Generation-aware ceiling (~3/4 of physical VMEM) so Mosaic keeps
    # internal-scratch headroom: 64 MiB per TC on v7x, 128 MiB on v5e/v6e.
    try:
        phys = int(pltpu.get_tpu_info().vmem_capacity_bytes)
    except Exception:  # conservative fallback if the query is unavailable
        phys = 64 * 1024 * 1024
    return phys * 3 // 4


def _conv3x3_bias_relu_kernel(x_ref, w_ref, b_ref, o_ref, *, H, W, Cin, Cout,
                              compute_dtype):
    # x_ref: (1, H+2, W+2, Cin) compute_dtype  padded NHWC image (this batch)
    # w_ref: (Cout, K=9*Cin)    compute_dtype  resident; (kh,kw,cin) minor order
    # b_ref: (Cout, 1)          f32            resident
    # o_ref: (1, Cout, H*W)     f32            NCHW output, spatial flattened
    K = KH * KW * Cin
    # In-VMEM im2col: 9 shifted (H, W, Cin) windows of the halo tile,
    # concatenated along lanes -> (H*W, K).  The shifts/concat run in f32 for
    # layout simplicity (tiny, hidden under the image DMA); MXU operands are
    # compute_dtype with an f32 accumulator.
    pieces = []
    for kh in range(KH):
        for kw in range(KW):
            p = x_ref[0, pl.ds(kh, H), pl.ds(kw, W), :]        # (H, W, Cin)
            pieces.append(p.astype(jnp.float32))
    xcol = jnp.concatenate(pieces, axis=-1)                    # (H, W, K)
    xcol = xcol.reshape(H * W, K).astype(compute_dtype)        # (M, K)
    # (Cout, K) x (M, K) contracted on K -> (Cout, M): one MXU matmul that
    # directly yields the NCHW-ordered tile (no post-kernel transpose).
    acc = jax.lax.dot_general(
        w_ref[...], xcol,
        dimension_numbers=(((1,), (1,)), ((), ())),
        preferred_element_type=jnp.float32)                    # (Cout, M) f32
    out = jnp.maximum(acc + b_ref[...], 0.0)                   # f32 epilogue
    o_ref[0] = out.astype(o_ref.dtype)


def _model_forward_impl(x_nchw, weight, bias, *, compute_dtype=jnp.bfloat16):
    """Forward of Model.features: Conv2d(3x3, s=1, p=1) + bias + ReLU.

    x_nchw : (N, Cin, H, W) float32      (PyTorch layout)
    weight : (Cout, Cin, KH, KW) float32 (PyTorch conv weight layout)
    bias   : (Cout,) float32
    returns: (N, Cout, H, W) float32
    """
    N, Cin, H, W = x_nchw.shape
    Cout = weight.shape[0]
    K = KH * KW * Cin
    M = H * W
    itemsize = jnp.dtype(compute_dtype).itemsize

    # Wrapper glue (all ~1x the small raw input; the 9x im2col expansion
    # happens inside the kernel, in VMEM).
    x_nhwc = jnp.transpose(x_nchw, (0, 2, 3, 1))                  # (N,H,W,Cin)
    x_pad = jnp.pad(x_nhwc, ((0, 0), (1, 1), (1, 1), (0, 0)))     # halo of 1
    x_pad = x_pad.astype(compute_dtype)

    # (Cout, K) weight with (kh, kw, cin) minor order matching the in-kernel
    # patch concat.  Unpadded: full-extent blocks are legal and Mosaic pads
    # the contraction internally for free.
    w2d = jnp.transpose(weight, (0, 2, 3, 1)).reshape(Cout, K).astype(compute_dtype)
    b2d = bias.reshape(Cout, 1).astype(jnp.float32)

    kernel = functools.partial(_conv3x3_bias_relu_kernel, H=H, W=W, Cin=Cin,
                               Cout=Cout, compute_dtype=compute_dtype)

    flops = 2 * N * M * K * Cout
    bytes_accessed = (N * (H + 2) * (W + 2) * Cin * itemsize   # activations in
                      + Cout * K * itemsize + Cout * 4         # weights / bias
                      + N * Cout * M * 4)                      # activations out
    needed_vmem = (2 * (H + 2) * (W + 2) * Cin * itemsize      # dbl-buffered image
                   + 2 * Cout * M * 4                          # dbl-buffered out
                   + Cout * K * itemsize + Cout * 4            # resident w / b
                   + (4 << 20))                                # headroom
    vmem_limit = int(min(_vmem_cap_bytes(), max(needed_vmem, 32 * 1024 * 1024)))

    out3d = pl.pallas_call(
        kernel,
        out_shape=jax.ShapeDtypeStruct((N, Cout, M), jnp.float32),
        grid_spec=pltpu.PrefetchScalarGridSpec(
            num_scalar_prefetch=0,
            grid=(N,),
            in_specs=[
                pl.BlockSpec((1, H + 2, W + 2, Cin), lambda n: (n, 0, 0, 0)),
                pl.BlockSpec((Cout, K), lambda n: (0, 0)),     # resident weight
                pl.BlockSpec((Cout, 1), lambda n: (0, 0)),     # resident bias
            ],
            out_specs=pl.BlockSpec((1, Cout, M), lambda n: (n, 0, 0)),
        ),
        compiler_params=pltpu.CompilerParams(
            dimension_semantics=("parallel",),
            vmem_limit_bytes=vmem_limit),
        cost_estimate=pl.CostEstimate(flops=flops, transcendentals=0,
                                      bytes_accessed=bytes_accessed),
    )(x_pad, w2d, b2d)

    # Free reshape (splits the minor dim); output is already NCHW.
    return out3d.reshape(N, Cout, H, W)


model_forward = jax.jit(_model_forward_impl, static_argnames=("compute_dtype",))


def _reference_forward(x_nchw, weight, bias):
    # Pure-JAX reference for correctness checking.
    out = jax.lax.conv_general_dilated(
        x_nchw, weight, window_strides=(1, 1), padding="SAME",
        dimension_numbers=("NCHW", "OIHW", "NCHW"))
    out = out + bias[None, :, None, None]
    return jnp.maximum(out, 0.0)


if __name__ == "__main__":
    # Small shapes consistent with the module's NCHW image input.
    N, Cin, H, W = 2, 3, 16, 16
    output_dim = 8

    key = jax.random.PRNGKey(0)
    kx, kw, kb = jax.random.split(key, 3)
    x = jax.random.normal(kx, (N, Cin, H, W), dtype=jnp.float32)
    weight = jax.random.normal(kw, (output_dim, Cin, KH, KW),
                               dtype=jnp.float32) * 0.1
    bias = jax.random.normal(kb, (output_dim,), dtype=jnp.float32) * 0.1

    ref = _reference_forward(x, weight, bias)

    # f32 MXU path (tight tolerance).
    out_f32 = jax.block_until_ready(
        model_forward(x, weight, bias, compute_dtype=jnp.float32))
    assert out_f32.shape == (N, output_dim, H, W)
    assert jnp.allclose(out_f32, ref, atol=1e-4, rtol=1e-4), "f32 mismatch vs reference"

    # Default path: bf16 MXU operands on all generations, f32 accumulation +
    # f32 bias/ReLU epilogue.
    out_bf16 = jax.block_until_ready(model_forward(x, weight, bias))
    assert out_bf16.shape == (N, output_dim, H, W)
    assert jnp.allclose(out_bf16, ref, atol=5e-2, rtol=5e-2), "bf16 mismatch vs reference"

    print("KERNEL_OK")
</pallas_src>

<mosaic_0001>
module attributes {stable_mosaic.version = 11 : i64} {
  func.func @_conv3x3_bias_relu_kernel(%arg0: i32, %arg1: memref<1x18x18x3xf32, #tpu.memory_space<vmem>>, %arg2: memref<8x27xf32, #tpu.memory_space<vmem>>, %arg3: memref<8x1xf32, #tpu.memory_space<vmem>>, %arg4: memref<1x8x256xf32, #tpu.memory_space<vmem>>) attributes {dimension_semantics = [#tpu.dimension_semantics<parallel>], iteration_bounds = array<i64: 2>, scalar_prefetch = 0 : i64, scratch_operands = 0 : i64, tpu.core_type = #tpu.core_type<tc>, window_params = [{transform_indices = @transform_0, window_bounds = array<i64: 1, 18, 18, 3>}, {pipeline_mode = #tpu.pipeline_mode<synchronous>, transform_indices = @transform_1, window_bounds = array<i64: 8, 27>}, {pipeline_mode = #tpu.pipeline_mode<synchronous>, transform_indices = @transform_2, window_bounds = array<i64: 8, 1>}, {transform_indices = @transform_3, window_bounds = array<i64: 1, 8, 256>}]} {
    %c0 = arith.constant 0 : index
    %c0_0 = arith.constant 0 : index
    %c0_1 = arith.constant 0 : index
    %c0_2 = arith.constant 0 : index
    %0 = vector.load %arg1[%c0, %c0_0, %c0_1, %c0_2] : memref<1x18x18x3xf32, #tpu.memory_space<vmem>>, vector<1x16x16x3xf32>
    %1 = vector.shape_cast %0 : vector<1x16x16x3xf32> to vector<16x16x3xf32>
    %c0_3 = arith.constant 0 : index
    %c0_4 = arith.constant 0 : index
    %c1 = arith.constant 1 : index
    %c0_5 = arith.constant 0 : index
    %2 = vector.load %arg1[%c0_3, %c0_4, %c1, %c0_5] : memref<1x18x18x3xf32, #tpu.memory_space<vmem>>, vector<1x16x16x3xf32>
    %3 = vector.shape_cast %2 : vector<1x16x16x3xf32> to vector<16x16x3xf32>
    %c0_6 = arith.constant 0 : index
    %c0_7 = arith.constant 0 : index
    %c2 = arith.constant 2 : index
    %c0_8 = arith.constant 0 : index
    %4 = vector.load %arg1[%c0_6, %c0_7, %c2, %c0_8] : memref<1x18x18x3xf32, #tpu.memory_space<vmem>>, vector<1x16x16x3xf32>
    %5 = vector.shape_cast %4 : vector<1x16x16x3xf32> to vector<16x16x3xf32>
    %c0_9 = arith.constant 0 : index
    %c1_10 = arith.constant 1 : index
    %c0_11 = arith.constant 0 : index
    %c0_12 = arith.constant 0 : index
    %6 = vector.load %arg1[%c0_9, %c1_10, %c0_11, %c0_12] : memref<1x18x18x3xf32, #tpu.memory_space<vmem>>, vector<1x16x16x3xf32>
    %7 = vector.shape_cast %6 : vector<1x16x16x3xf32> to vector<16x16x3xf32>
    %c0_13 = arith.constant 0 : index
    %c1_14 = arith.constant 1 : index
    %c1_15 = arith.constant 1 : index
    %c0_16 = arith.constant 0 : index
    %8 = vector.load %arg1[%c0_13, %c1_14, %c1_15, %c0_16] : memref<1x18x18x3xf32, #tpu.memory_space<vmem>>, vector<1x16x16x3xf32>
    %9 = vector.shape_cast %8 : vector<1x16x16x3xf32> to vector<16x16x3xf32>
    %c0_17 = arith.constant 0 : index
    %c1_18 = arith.constant 1 : index
    %c2_19 = arith.constant 2 : index
    %c0_20 = arith.constant 0 : index
    %10 = vector.load %arg1[%c0_17, %c1_18, %c2_19, %c0_20] : memref<1x18x18x3xf32, #tpu.memory_space<vmem>>, vector<1x16x16x3xf32>
    %11 = vector.shape_cast %10 : vector<1x16x16x3xf32> to vector<16x16x3xf32>
    %c0_21 = arith.constant 0 : index
    %c2_22 = arith.constant 2 : index
    %c0_23 = arith.constant 0 : index
    %c0_24 = arith.constant 0 : index
    %12 = vector.load %arg1[%c0_21, %c2_22, %c0_23, %c0_24] : memref<1x18x18x3xf32, #tpu.memory_space<vmem>>, vector<1x16x16x3xf32>
    %13 = vector.shape_cast %12 : vector<1x16x16x3xf32> to vector<16x16x3xf32>
    %c0_25 = arith.constant 0 : index
    %c2_26 = arith.constant 2 : index
    %c1_27 = arith.constant 1 : index
    %c0_28 = arith.constant 0 : index
    %14 = vector.load %arg1[%c0_25, %c2_26, %c1_27, %c0_28] : memref<1x18x18x3xf32, #tpu.memory_space<vmem>>, vector<1x16x16x3xf32>
    %15 = vector.shape_cast %14 : vector<1x16x16x3xf32> to vector<16x16x3xf32>
    %c0_29 = arith.constant 0 : index
    %c2_30 = arith.constant 2 : index
    %c2_31 = arith.constant 2 : index
    %c0_32 = arith.constant 0 : index
    %16 = vector.load %arg1[%c0_29, %c2_30, %c2_31, %c0_32] : memref<1x18x18x3xf32, #tpu.memory_space<vmem>>, vector<1x16x16x3xf32>
    %17 = vector.shape_cast %16 : vector<1x16x16x3xf32> to vector<16x16x3xf32>
    %18 = tpu.concatenate %1, %3, %5, %7, %9, %11, %13, %15, %17 in 2 : vector<16x16x3xf32>, vector<16x16x3xf32>, vector<16x16x3xf32>, vector<16x16x3xf32>, vector<16x16x3xf32>, vector<16x16x3xf32>, vector<16x16x3xf32>, vector<16x16x3xf32>, vector<16x16x3xf32> -> vector<16x16x27xf32>
    %19 = vector.shape_cast %18 : vector<16x16x27xf32> to vector<256x27xf32>
    %c0_33 = arith.constant 0 : index
    %c0_34 = arith.constant 0 : index
    %20 = vector.load %arg2[%c0_33, %c0_34] : memref<8x27xf32, #tpu.memory_space<vmem>>, vector<8x27xf32>
    %cst = arith.constant dense<0.000000e+00> : vector<8x256xf32>
    %21 = tpu.matmul %20, %19, %cst {dimension_numbers = #tpu.dot_dimension_numbers<[1], [1], [0], [0], [0, 0, 1, 0], [], []>} : vector<8x27xf32>, vector<256x27xf32>, vector<8x256xf32> -> vector<8x256xf32>
    %c0_35 = arith.constant 0 : index
    %c0_36 = arith.constant 0 : index
    %22 = vector.load %arg3[%c0_35, %c0_36] : memref<8x1xf32, #tpu.memory_space<vmem>>, vector<8x1xf32>
    %23 = vector.broadcast %22 : vector<8x1xf32> to vector<8x256xf32>
    %24 = arith.addf %21, %23 : vector<8x256xf32>
    %cst_37 = arith.constant 0.000000e+00 : f32
    %25 = vector.broadcast %cst_37 : f32 to vector<8x256xf32>
    %26 = arith.maximumf %24, %25 : vector<8x256xf32>
    %c0_38 = arith.constant 0 : index
    %c0_39 = arith.constant 0 : index
    %c0_40 = arith.constant 0 : index
    %27 = vector.load %arg4[%c0_38, %c0_39, %c0_40] : memref<1x8x256xf32, #tpu.memory_space<vmem>>, vector<1x8x256xf32>
    %28 = vector.shape_cast %27 : vector<1x8x256xf32> to vector<8x256xf32>
    %29 = vector.shape_cast %26 : vector<8x256xf32> to vector<1x8x256xf32>
    tpu.vector_store %arg4[%c0_38, %c0_39, %c0_40], %29 {strides = array<i32>} : memref<1x8x256xf32, #tpu.memory_space<vmem>>, vector<1x8x256xf32>,
    return
  }
  func.func @transform_0(%arg0: i32) -> (i32, i32, i32, i32) {
    %c0_i32 = arith.constant 0 : i32
    %c0_i32_0 = arith.constant 0 : i32
    %c0_i32_1 = arith.constant 0 : i32
    %c0_i32_2 = arith.constant 0 : i32
    return %arg0, %c0_i32, %c0_i32_0, %c0_i32_1 : i32, i32, i32, i32
  }
  func.func @transform_1(%arg0: i32) -> (i32, i32) {
    %c0_i32 = arith.constant 0 : i32
    %c0_i32_0 = arith.constant 0 : i32
    %c0_i32_1 = arith.constant 0 : i32
    return %c0_i32, %c0_i32_0 : i32, i32
  }
  func.func @transform_2(%arg0: i32) -> (i32, i32) {
    %c0_i32 = arith.constant 0 : i32
    %c0_i32_0 = arith.constant 0 : i32
    %c0_i32_1 = arith.constant 0 : i32
    return %c0_i32, %c0_i32_0 : i32, i32
  }
  func.func @transform_3(%arg0: i32) -> (i32, i32, i32) {
    %c0_i32 = arith.constant 0 : i32
    %c0_i32_0 = arith.constant 0 : i32
    %c0_i32_1 = arith.constant 0 : i32
    return %arg0, %c0_i32, %c0_i32_0 : i32, i32, i32
  }
}

</mosaic_0001>

<llo_original>
// kernel: _model_forward_impl.1
$region0: #{_model_forward_impl.1}
  #allocation0 [shape = 'u32[]', space=smem, size = 0x4, offset = 0x4, fixed_abs, tag = 'smem constant byte address 0x4 - core index']
  #allocation1 [shape = 'u32[72,128]{1,0:T(1,128)}', space=vmem, size = 0x9000, scoped, tag = 'internal scratch']
  %s0 = inlined_call_operand.vmem [shape: f32[2,18,18,3], index: 0, kind: input, shape index: {}]
  %s1 = inlined_call_operand.vmem [shape: f32[8,27], index: 1, kind: input, shape index: {}]
  %s2 = inlined_call_operand.vmem [shape: f32[8,1], index: 2, kind: input, shape index: {}]
  %s3 = inlined_call_operand.vmem [shape: f32[2,8,256], index: 3, kind: output, shape index: {}]
  %s4 = sld [smem:[#allocation0]]
  $region45: #{_model_forward_impl.1} parent=0
    _
  %s6 = ssub.s32 1, %s4
  %s7 = scalar_select 0, %s6, %s4
  loop: start=0, step=1, limit=4
  $region2: #{_model_forward_impl.1} parent=0 // loop_pre_header
    _
  $region3: #{_model_forward_impl.1} parent=0 // loop_header
    %s9 = sphi 0, %s13
    %p10 = scmp.ge.s32.totalorder %s9, 4
    %s19 = sphi 0, %s21
    %s22 = sphi 0, %s19
    %s23 = sphi 0, %s22
    %s39 = sphi 0, %s23
    %s43 = sphi 0, %s43
    %s45 = sphi 0, %s43
    %s46 = sphi 0, %s45
    %s60 = sphi 0, %s46
    %s64 = sphi 0, %s64
    %s66 = sphi 0, %s64
    %s67 = sphi 0, %s66
    %s81 = sphi 0, %s67
    %s87 = sphi 0, %s89
    %s90 = sphi 0, %s87
    %s91 = sphi 0, %s90
    %s107 = sphi 0, %s91
  $region4: #{_model_forward_impl.1} parent=0 // loop_header_branch
    %12 = sbr.rel (%p10) target = $region8
  $region5: #{_model_forward_impl.1} parent=0 // loop_body
    %s14 = ssub.s32 %s9, 1
    %s15 = ssub.s32 %s9, 2
    %s16 = sadd.s32 %s9, 1
    %s17 = ssub.s32 %s9, %s16
    %p18 = scmp.eq.s32.totalorder %s17, 0
    %s20 = sadd.s32 %s19, 1
    %s21 = scalar_select %p18, %s19, %s20
    %p24 = pneg %p18
    %p25 = scmp.eq.s32.totalorder %s9, 1
    %p26 = por %p24, %p25
    %p27 = scmp.ne.s32.totalorder %s19, %s22
    %p28 = scmp.eq.s32.totalorder %s9, 0
    %p29 = por %p27, %p28
    %p30 = scmp.ne.s32.totalorder %s19, %s22
    %p31 = scmp.eq.s32.totalorder %s14, 1
    %p32 = por %p30, %p31
    %p33 = scmp.ne.s32.totalorder %s22, %s23
    %p34 = scmp.eq.s32.totalorder %s14, 0
    %p35 = por %p33, %p34
    %p36 = scmp.ne.s32.totalorder %s22, %s23
    %p37 = scmp.eq.s32.totalorder %s15, 1
    %p38 = por %p36, %p37
    %p40 = scmp.ne.s32.totalorder %s23, %s39
    %p41 = scmp.eq.s32.totalorder %s15, 0
    %p42 = por %p40, %p41
    %s44 = sadd.s32 %s43, 1
    %p47 = scmp.eq.s32.totalorder %s9, 1
    %p48 = scmp.ne.s32.totalorder %s43, %s45
    %p49 = scmp.eq.s32.totalorder %s9, 0
    %p50 = por %p48, %p49
    %p51 = scmp.ne.s32.totalorder %s43, %s45
    %p52 = scmp.eq.s32.totalorder %s14, 1
    %p53 = por %p51, %p52
    %p54 = scmp.ne.s32.totalorder %s45, %s46
    %p55 = scmp.eq.s32.totalorder %s14, 0
    %p56 = por %p54, %p55
    %p57 = scmp.ne.s32.totalorder %s45, %s46
    %p58 = scmp.eq.s32.totalorder %s15, 1
    %p59 = por %p57, %p58
    %p61 = scmp.ne.s32.totalorder %s46, %s60
    %p62 = scmp.eq.s32.totalorder %s15, 0
    %p63 = por %p61, %p62
    %s65 = sadd.s32 %s64, 1
    %p68 = scmp.eq.s32.totalorder %s9, 1
    %p69 = scmp.ne.s32.totalorder %s64, %s66
    %p70 = scmp.eq.s32.totalorder %s9, 0
    %p71 = por %p69, %p70
    %p72 = scmp.ne.s32.totalorder %s64, %s66
    %p73 = scmp.eq.s32.totalorder %s14, 1
    %p74 = por %p72, %p73
    %p75 = scmp.ne.s32.totalorder %s66, %s67
    %p76 = scmp.eq.s32.totalorder %s14, 0
    %p77 = por %p75, %p76
    %p78 = scmp.ne.s32.totalorder %s66, %s67
    %p79 = scmp.eq.s32.totalorder %s15, 1
    %p80 = por %p78, %p79
    %p82 = scmp.ne.s32.totalorder %s67, %s81
    %p83 = scmp.eq.s32.totalorder %s15, 0
    %p84 = por %p82, %p83
    %s85 = ssub.s32 %s9, %s16
    %p86 = scmp.eq.s32.totalorder %s85, 0
    %s88 = sadd.s32 %s87, 1
    %s89 = scalar_select %p86, %s87, %s88
    %p92 = pneg %p86
    %p93 = scmp.eq.s32.totalorder %s9, 1
    %p94 = por %p92, %p93
    %p95 = scmp.ne.s32.totalorder %s87, %s90
    %p96 = scmp.eq.s32.totalorder %s9, 0
    %p97 = por %p95, %p96
    %p98 = scmp.ne.s32.totalorder %s87, %s90
    %p99 = scmp.eq.s32.totalorder %s14, 1
    %p100 = por %p98, %p99
    %p101 = scmp.ne.s32.totalorder %s90, %s91
    %p102 = scmp.eq.s32.totalorder %s14, 0
    %p103 = por %p101, %p102
    %p104 = scmp.ne.s32.totalorder %s90, %s91
    %p105 = scmp.eq.s32.totalorder %s15, 1
    %p106 = por %p104, %p105
    %p108 = scmp.ne.s32.totalorder %s91, %s107
    %p109 = scmp.eq.s32.totalorder %s15, 0
    %p110 = por %p108, %p109
    %p111 = scmp.le.s32.totalorder 1, %s9
    %p112 = scmp.lt.s32.totalorder %s9, 3
    %p113 = pnand %p111, %p112
    %p114 = pneg %p113
    // Predicated region
    $region9: #{_model_forward_impl.1} parent=5 // pred_check
      _
    $region10: #{_model_forward_impl.1} parent=5 // pred_check_branch
      %116 = sbr.rel (%p113) target = $region12
    $region11: #{_model_forward_impl.1} parent=5 // pred_region
      %s117 = ssub.s32 %s9, 1
      // Predicated region
      $region13: #{_model_forward_impl.1} parent=11 // pred_check
        %p118 = pneg %p56
      $region14: #{_model_forward_impl.1} parent=11 // pred_check_branch
        %120 = sbr.rel (%p118) target = $region16
      $region15: #{_model_forward_impl.1} parent=11 // pred_region
        _
      $region16: #{_model_forward_impl.1} parent=11 // pred_fallthru
        _
      // Predicated region
      $region17: #{_model_forward_impl.1} parent=11 // pred_check
        %p121 = pneg %p77
      $region18: #{_model_forward_impl.1} parent=11 // pred_check_branch
        %123 = sbr.rel (%p121) target = $region20
      $region19: #{_model_forward_impl.1} parent=11 // pred_region
        _
      $region20: #{_model_forward_impl.1} parent=11 // pred_fallthru
        _
    $region12: #{_model_forward_impl.1} parent=5 // pred_fallthru
      _
    %p124 = scmp.lt.s32.totalorder %s9, 2
    // Predicated region
    $region21: #{_model_forward_impl.1} parent=5 // pred_check
      %p125 = pneg %p124
    $region22: #{_model_forward_impl.1} parent=5 // pred_check_branch
      %127 = sbr.rel (%p125) target = $region24
    $region23: #{_model_forward_impl.1} parent=5 // pred_region
      // Predicated region
      $region25: #{_model_forward_impl.1} parent=23 // pred_check
        %p128 = pneg %p29
      $region26: #{_model_forward_impl.1} parent=23 // pred_check_branch
        %130 = sbr.rel (%p128) target = $region28
      $region27: #{_model_forward_impl.1} parent=23 // pred_region
        %p131 = scmp.lt.s32.totalorder %s9, 1
        %s132 = scalar_select %p131, %s9, 1
        %s133 = smul.addr %s132, 54
        %s134 = smul.addr %s133, 8
        %s135 = scalar_lea.vmem %s0, %s134
      $region28: #{_model_forward_impl.1} parent=23 // pred_fallthru
        _
    $region24: #{_model_forward_impl.1} parent=5 // pred_fallthru
      _
    %p136 = scmp.le.s32.totalorder 1, %s9
    %p137 = scmp.lt.s32.totalorder %s9, 3
    %p138 = pnand %p136, %p137
    %p139 = pneg %p138
    // Predicated region
    $region29: #{_model_forward_impl.1} parent=5 // pred_check
      _
    $region30: #{_model_forward_impl.1} parent=5 // pred_check_branch
      %141 = sbr.rel (%p138) target = $region32
    $region31: #{_model_forward_impl.1} parent=5 // pred_region
      %s142 = ssub.s32 %s9, 1
      %p143 = scmp.lt.s32.totalorder %s14, 1
      %s144 = scalar_select %p143, %s14, 1
      %s145 = smul.addr %s144, 54
      %s146 = smul.addr %s145, 8
      %s147 = scalar_lea.vmem %s0, %s146
      %p148 = pneg %p35
      %p149 = pneg %p32
      %p150 = pneg %p56
      %p151 = pneg %p53
      %p152 = pneg %p77
      %p153 = pneg %p74
      %p154 = pneg %p103
      %p155 = pneg %p100
      %p156 = scmp.lt.s32.totalorder %s14, 1
      %s157 = scalar_select %p156, %s14, 1
      %s158 = smul.addr %s157, 2
      %s159 = smul.addr %s158, 8
      %s160 = scalar_lea.vmem %s3, %s159
      %p161 = scmp.lt.s32.totalorder %s14, 1
      %s162 = scalar_select %p161, %s14, 1
      %s163 = smul.addr %s162, 54
      %s164 = smul.addr %s163, 8
      %s165 = scalar_lea.vmem %s0, %s164
      %p166 = scmp.lt.s32.totalorder %s14, 1
      %s167 = scalar_select %p166, %s14, 1
      %s168 = smul.addr %s167, 2
      %s169 = smul.addr %s168, 8
      %s170 = scalar_lea.vmem %s3, %s169
      %v171 = vld [vmem:[%s165] sm:$0xff]
      %v172 = vld [vmem:[%s165 + $0x8] sm:$0xff]
      %v173 = vld [vmem:[%s165 + $0x18] sm:$0xff]
      %v174 = vld [vmem:[%s165 + $0x20] sm:$0xff]
      %v175 = vld [vmem:[%s165 + $0x30] sm:$0xff]
      %v176 = vld [vmem:[%s165 + $0x38] sm:$0xff]
      %v177 = vld [vmem:[%s165 + $0x48] sm:$0xff]
      %v178 = vld [vmem:[%s165 + $0x50] sm:$0xff]
      %v179 = vld [vmem:[%s165 + $0x60] sm:$0xff]
      %v180 = vld [vmem:[%s165 + $0x68] sm:$0xff]
      %v181 = vld [vmem:[%s165 + $0x78] sm:$0xff]
      %v182 = vld [vmem:[%s165 + $0x80] sm:$0xff]
      %v183 = vld [vmem:[%s165 + $0x90] sm:$0xff]
      %v184 = vld [vmem:[%s165 + $0x98] sm:$0xff]
      %v185 = vld [vmem:[%s165 + $0xa8] sm:$0xff]
      %v186 = vld [vmem:[%s165 + $0xb0] sm:$0xff]
      %v187 = vld [vmem:[%s165 + $0xc0] sm:$0xff]
      %v188 = vld [vmem:[%s165 + $0xc8] sm:$0xff]
      %v189 = vld [vmem:[%s165 + $0xd8] sm:$0xff]
      %v190 = vld [vmem:[%s165 + $0xe0] sm:$0xff]
      %v191 = vld [vmem:[%s165 + $0xf0] sm:$0xff]
      %v192 = vld [vmem:[%s165 + $0xf8] sm:$0xff]
      %v193 = vld [vmem:[%s165 + $0x108] sm:$0xff]
      %v194 = vld [vmem:[%s165 + $0x110] sm:$0xff]
      %v195 = vld [vmem:[%s165 + $0x120] sm:$0xff]
      %v196 = vld [vmem:[%s165 + $0x128] sm:$0xff]
      %v197 = vld [vmem:[%s165 + $0x138] sm:$0xff]
      %v198 = vld [vmem:[%s165 + $0x140] sm:$0xff]
      %v199 = vld [vmem:[%s165 + $0x150] sm:$0xff]
      %v200 = vld [vmem:[%s165 + $0x158] sm:$0xff]
      %v201 = vld [vmem:[%s165 + $0x168] sm:$0xff]
      %v202 = vld [vmem:[%s165 + $0x170] sm:$0xff]
      %v203 = vld [vmem:[%s165 + $0x1] sm:$0xff]
      %v204 = vld [vmem:[%s165 + $0x9] sm:$0xff]
      %v205 = vld [vmem:[%s165 + $0x19] sm:$0xff]
      %v206 = vld [vmem:[%s165 + $0x21] sm:$0xff]
      %v207 = vld [vmem:[%s165 + $0x31] sm:$0xff]
      %v208 = vld [vmem:[%s165 + $0x39] sm:$0xff]
      %v209 = vld [vmem:[%s165 + $0x49] sm:$0xff]
      %v210 = vld [vmem:[%s165 + $0x51] sm:$0xff]
      %v211 = vld [vmem:[%s165 + $0x61] sm:$0xff]
      %v212 = vld [vmem:[%s165 + $0x69] sm:$0xff]
      %v213 = vld [vmem:[%s165 + $0x79] sm:$0xff]
      %v214 = vld [vmem:[%s165 + $0x81] sm:$0xff]
      %v215 = vld [vmem:[%s165 + $0x91] sm:$0xff]
      %v216 = vld [vmem:[%s165 + $0x99] sm:$0xff]
      %v217 = vld [vmem:[%s165 + $0xa9] sm:$0xff]
      %v218 = vld [vmem:[%s165 + $0xb1] sm:$0xff]
      %v219 = vld [vmem:[%s165 + $0xc1] sm:$0xff]
      %v220 = vld [vmem:[%s165 + $0xc9] sm:$0xff]
      %v221 = vld [vmem:[%s165 + $0xd9] sm:$0xff]
      %v222 = vld [vmem:[%s165 + $0xe1] sm:$0xff]
      %v223 = vld [vmem:[%s165 + $0xf1] sm:$0xff]
      %v224 = vld [vmem:[%s165 + $0xf9] sm:$0xff]
      %v225 = vld [vmem:[%s165 + $0x109] sm:$0xff]
      %v226 = vld [vmem:[%s165 + $0x111] sm:$0xff]
      %v227 = vld [vmem:[%s165 + $0x121] sm:$0xff]
      %v228 = vld [vmem:[%s165 + $0x129] sm:$0xff]
      %v229 = vld [vmem:[%s165 + $0x139] sm:$0xff]
      %v230 = vld [vmem:[%s165 + $0x141] sm:$0xff]
      %v231 = vld [vmem:[%s165 + $0x151] sm:$0xff]
      %v232 = vld [vmem:[%s165 + $0x159] sm:$0xff]
      %v233 = vld [vmem:[%s165 + $0x169] sm:$0xff]
      %v234 = vld [vmem:[%s165 + $0x171] sm:$0xff]
      %v235 = vld [vmem:[%s165 + $0x2] sm:$0xff]
      %v236 = vld [vmem:[%s165 + $0xa] sm:$0xff]
      %v237 = vld [vmem:[%s165 + $0x1a] sm:$0xff]
      %v238 = vld [vmem:[%s165 + $0x22] sm:$0xff]
      %v239 = vld [vmem:[%s165 + $0x32] sm:$0xff]
      %v240 = vld [vmem:[%s165 + $0x3a] sm:$0xff]
      %v241 = vld [vmem:[%s165 + $0x4a] sm:$0xff]
      %v242 = vld [vmem:[%s165 + $0x52] sm:$0xff]
      %v243 = vld [vmem:[%s165 + $0x62] sm:$0xff]
      %v244 = vld [vmem:[%s165 + $0x6a] sm:$0xff]
      %v245 = vld [vmem:[%s165 + $0x7a] sm:$0xff]
      %v246 = vld [vmem:[%s165 + $0x82] sm:$0xff]
      %v247 = vld [vmem:[%s165 + $0x92] sm:$0xff]
      %v248 = vld [vmem:[%s165 + $0x9a] sm:$0xff]
      %v249 = vld [vmem:[%s165 + $0xaa] sm:$0xff]
      %v250 = vld [vmem:[%s165 + $0xb2] sm:$0xff]
      %v251 = vld [vmem:[%s165 + $0xc2] sm:$0xff]
      %v252 = vld [vmem:[%s165 + $0xca] sm:$0xff]
      %v253 = vld [vmem:[%s165 + $0xda] sm:$0xff]
      %v254 = vld [vmem:[%s165 + $0xe2] sm:$0xff]
      %v255 = vld [vmem:[%s165 + $0xf2] sm:$0xff]
      %v256 = vld [vmem:[%s165 + $0xfa] sm:$0xff]
      %v257 = vld [vmem:[%s165 + $0x10a] sm:$0xff]
      %v258 = vld [vmem:[%s165 + $0x112] sm:$0xff]
      %v259 = vld [vmem:[%s165 + $0x122] sm:$0xff]
      %v260 = vld [vmem:[%s165 + $0x12a] sm:$0xff]
      %v261 = vld [vmem:[%s165 + $0x13a] sm:$0xff]
      %v262 = vld [vmem:[%s165 + $0x142] sm:$0xff]
      %v263 = vld [vmem:[%s165 + $0x152] sm:$0xff]
      %v264 = vld [vmem:[%s165 + $0x15a] sm:$0xff]
      %v265 = vld [vmem:[%s165 + $0x16a] sm:$0xff]
      %v266 = vld [vmem:[%s165 + $0x172] sm:$0xff]
      %s267 = scalar_lea.vmem %s165, 24
      %v268 = vld [vmem:[%s267] sm:$0xff]
      %v269 = vld [vmem:[%s267 + $0x8] sm:$0xff]
      %v270 = vld [vmem:[%s267 + $0x18] sm:$0xff]
      %v271 = vld [vmem:[%s267 + $0x20] sm:$0xff]
      %v272 = vld [vmem:[%s267 + $0x30] sm:$0xff]
      %v273 = vld [vmem:[%s267 + $0x38] sm:$0xff]
      %v274 = vld [vmem:[%s267 + $0x48] sm:$0xff]
      %v275 = vld [vmem:[%s267 + $0x50] sm:$0xff]
      %v276 = vld [vmem:[%s267 + $0x60] sm:$0xff]
      %v277 = vld [vmem:[%s267 + $0x68] sm:$0xff]
      %v278 = vld [vmem:[%s267 + $0x78] sm:$0xff]
      %v279 = vld [vmem:[%s267 + $0x80] sm:$0xff]
      %v280 = vld [vmem:[%s267 + $0x90] sm:$0xff]
      %v281 = vld [vmem:[%s267 + $0x98] sm:$0xff]
      %v282 = vld [vmem:[%s267 + $0xa8] sm:$0xff]
      %v283 = vld [vmem:[%s267 + $0xb0] sm:$0xff]
      %v284 = vld [vmem:[%s267 + $0xc0] sm:$0xff]
      %v285 = vld [vmem:[%s267 + $0xc8] sm:$0xff]
      %v286 = vld [vmem:[%s267 + $0xd8] sm:$0xff]
      %v287 = vld [vmem:[%s267 + $0xe0] sm:$0xff]
      %v288 = vld [vmem:[%s267 + $0xf0] sm:$0xff]
      %v289 = vld [vmem:[%s267 + $0xf8] sm:$0xff]
      %v290 = vld [vmem:[%s267 + $0x108] sm:$0xff]
      %v291 = vld [vmem:[%s267 + $0x110] sm:$0xff]
      %v292 = vld [vmem:[%s267 + $0x120] sm:$0xff]
      %v293 = vld [vmem:[%s267 + $0x128] sm:$0xff]
      %v294 = vld [vmem:[%s267 + $0x138] sm:$0xff]
      %v295 = vld [vmem:[%s267 + $0x140] sm:$0xff]
      %v296 = vld [vmem:[%s267 + $0x150] sm:$0xff]
      %v297 = vld [vmem:[%s267 + $0x158] sm:$0xff]
      %v298 = vld [vmem:[%s267 + $0x168] sm:$0xff]
      %v299 = vld [vmem:[%s267 + $0x170] sm:$0xff]
      %v300 = vld [vmem:[%s267 + $0x1] sm:$0xff]
      %v301 = vld [vmem:[%s267 + $0x9] sm:$0xff]
      %v302 = vld [vmem:[%s267 + $0x19] sm:$0xff]
      %v303 = vld [vmem:[%s267 + $0x21] sm:$0xff]
      %v304 = vld [vmem:[%s267 + $0x31] sm:$0xff]
      %v305 = vld [vmem:[%s267 + $0x39] sm:$0xff]
      %v306 = vld [vmem:[%s267 + $0x49] sm:$0xff]
      %v307 = vld [vmem:[%s267 + $0x51] sm:$0xff]
      %v308 = vld [vmem:[%s267 + $0x61] sm:$0xff]
      %v309 = vld [vmem:[%s267 + $0x69] sm:$0xff]
      %v310 = vld [vmem:[%s267 + $0x79] sm:$0xff]
      %v311 = vld [vmem:[%s267 + $0x81] sm:$0xff]
      %v312 = vld [vmem:[%s267 + $0x91] sm:$0xff]
      %v313 = vld [vmem:[%s267 + $0x99] sm:$0xff]
      %v314 = vld [vmem:[%s267 + $0xa9] sm:$0xff]
      %v315 = vld [vmem:[%s267 + $0xb1] sm:$0xff]
      %v316 = vld [vmem:[%s267 + $0xc1] sm:$0xff]
      %v317 = vld [vmem:[%s267 + $0xc9] sm:$0xff]
      %v318 = vld [vmem:[%s267 + $0xd9] sm:$0xff]
      %v319 = vld [vmem:[%s267 + $0xe1] sm:$0xff]
      %v320 = vld [vmem:[%s267 + $0xf1] sm:$0xff]
      %v321 = vld [vmem:[%s267 + $0xf9] sm:$0xff]
      %v322 = vld [vmem:[%s267 + $0x109] sm:$0xff]
      %v323 = vld [vmem:[%s267 + $0x111] sm:$0xff]
      %v324 = vld [vmem:[%s267 + $0x121] sm:$0xff]
      %v325 = vld [vmem:[%s267 + $0x129] sm:$0xff]
      %v326 = vld [vmem:[%s267 + $0x139] sm:$0xff]
      %v327 = vld [vmem:[%s267 + $0x141] sm:$0xff]
      %v328 = vld [vmem:[%s267 + $0x151] sm:$0xff]
      %v329 = vld [vmem:[%s267 + $0x159] sm:$0xff]
      %v330 = vld [vmem:[%s267 + $0x169] sm:$0xff]
      %v331 = vld [vmem:[%s267 + $0x171] sm:$0xff]
      %v332 = vld [vmem:[%s267 + $0x2] sm:$0xff]
      %v333 = vld [vmem:[%s267 + $0xa] sm:$0xff]
      %v334 = vld [vmem:[%s267 + $0x1a] sm:$0xff]
      %v335 = vld [vmem:[%s267 + $0x22] sm:$0xff]
      %v336 = vld [vmem:[%s267 + $0x32] sm:$0xff]
      %v337 = vld [vmem:[%s267 + $0x3a] sm:$0xff]
      %v338 = vld [vmem:[%s267 + $0x4a] sm:$0xff]
      %v339 = vld [vmem:[%s267 + $0x52] sm:$0xff]
      %v340 = vld [vmem:[%s267 + $0x62] sm:$0xff]
      %v341 = vld [vmem:[%s267 + $0x6a] sm:$0xff]
      %v342 = vld [vmem:[%s267 + $0x7a] sm:$0xff]
      %v343 = vld [vmem:[%s267 + $0x82] sm:$0xff]
      %v344 = vld [vmem:[%s267 + $0x92] sm:$0xff]
      %v345 = vld [vmem:[%s267 + $0x9a] sm:$0xff]
      %v346 = vld [vmem:[%s267 + $0xaa] sm:$0xff]
      %v347 = vld [vmem:[%s267 + $0xb2] sm:$0xff]
      %v348 = vld [vmem:[%s267 + $0xc2] sm:$0xff]
      %v349 = vld [vmem:[%s267 + $0xca] sm:$0xff]
      %v350 = vld [vmem:[%s267 + $0xda] sm:$0xff]
      %v351 = vld [vmem:[%s267 + $0xe2] sm:$0xff]
      %v352 = vld [vmem:[%s267 + $0xf2] sm:$0xff]
      %v353 = vld [vmem:[%s267 + $0xfa] sm:$0xff]
      %v354 = vld [vmem:[%s267 + $0x10a] sm:$0xff]
      %v355 = vld [vmem:[%s267 + $0x112] sm:$0xff]
      %v356 = vld [vmem:[%s267 + $0x122] sm:$0xff]
      %v357 = vld [vmem:[%s267 + $0x12a] sm:$0xff]
      %v358 = vld [vmem:[%s267 + $0x13a] sm:$0xff]
      %v359 = vld [vmem:[%s267 + $0x142] sm:$0xff]
      %v360 = vld [vmem:[%s267 + $0x152] sm:$0xff]
      %v361 = vld [vmem:[%s267 + $0x15a] sm:$0xff]
      %v362 = vld [vmem:[%s267 + $0x16a] sm:$0xff]
      %v363 = vld [vmem:[%s267 + $0x172] sm:$0xff]
      %s364 = scalar_lea.vmem %s165, 48
      %v365 = vld [vmem:[%s364] sm:$0xff]
      %v366 = vld [vmem:[%s364 + $0x8] sm:$0xff]
      %v367 = vld [vmem:[%s364 + $0x18] sm:$0xff]
      %v368 = vld [vmem:[%s364 + $0x20] sm:$0xff]
      %v369 = vld [vmem:[%s364 + $0x30] sm:$0xff]
      %v370 = vld [vmem:[%s364 + $0x38] sm:$0xff]
      %v371 = vld [vmem:[%s364 + $0x48] sm:$0xff]
      %v372 = vld [vmem:[%s364 + $0x50] sm:$0xff]
      %v373 = vld [vmem:[%s364 + $0x60] sm:$0xff]
      %v374 = vld [vmem:[%s364 + $0x68] sm:$0xff]
      %v375 = vld [vmem:[%s364 + $0x78] sm:$0xff]
      %v376 = vld [vmem:[%s364 + $0x80] sm:$0xff]
      %v377 = vld [vmem:[%s364 + $0x90] sm:$0xff]
      %v378 = vld [vmem:[%s364 + $0x98] sm:$0xff]
      %v379 = vld [vmem:[%s364 + $0xa8] sm:$0xff]
      %v380 = vld [vmem:[%s364 + $0xb0] sm:$0xff]
      %v381 = vld [vmem:[%s364 + $0xc0] sm:$0xff]
      %v382 = vld [vmem:[%s364 + $0xc8] sm:$0xff]
      %v383 = vld [vmem:[%s364 + $0xd8] sm:$0xff]
      %v384 = vld [vmem:[%s364 + $0xe0] sm:$0xff]
      %v385 = vld [vmem:[%s364 + $0xf0] sm:$0xff]
      %v386 = vld [vmem:[%s364 + $0xf8] sm:$0xff]
      %v387 = vld [vmem:[%s364 + $0x108] sm:$0xff]
      %v388 = vld [vmem:[%s364 + $0x110] sm:$0xff]
      %v389 = vld [vmem:[%s364 + $0x120] sm:$0xff]
      %v390 = vld [vmem:[%s364 + $0x128] sm:$0xff]
      %v391 = vld [vmem:[%s364 + $0x138] sm:$0xff]
      %v392 = vld [vmem:[%s364 + $0x140] sm:$0xff]
      %v393 = vld [vmem:[%s364 + $0x150] sm:$0xff]
      %v394 = vld [vmem:[%s364 + $0x158] sm:$0xff]
      %v395 = vld [vmem:[%s364 + $0x168] sm:$0xff]
      %v396 = vld [vmem:[%s364 + $0x170] sm:$0xff]
      %v397 = vld [vmem:[%s364 + $0x1] sm:$0xff]
      %v398 = vld [vmem:[%s364 + $0x9] sm:$0xff]
      %v399 = vld [vmem:[%s364 + $0x19] sm:$0xff]
      %v400 = vld [vmem:[%s364 + $0x21] sm:$0xff]
      %v401 = vld [vmem:[%s364 + $0x31] sm:$0xff]
      %v402 = vld [vmem:[%s364 + $0x39] sm:$0xff]
      %v403 = vld [vmem:[%s364 + $0x49] sm:$0xff]
      %v404 = vld [vmem:[%s364 + $0x51] sm:$0xff]
      %v405 = vld [vmem:[%s364 + $0x61] sm:$0xff]
      %v406 = vld [vmem:[%s364 + $0x69] sm:$0xff]
      %v407 = vld [vmem:[%s364 + $0x79] sm:$0xff]
      %v408 = vld [vmem:[%s364 + $0x81] sm:$0xff]
      %v409 = vld [vmem:[%s364 + $0x91] sm:$0xff]
      %v410 = vld [vmem:[%s364 + $0x99] sm:$0xff]
      %v411 = vld [vmem:[%s364 + $0xa9] sm:$0xff]
      %v412 = vld [vmem:[%s364 + $0xb1] sm:$0xff]
      %v413 = vld [vmem:[%s364 + $0xc1] sm:$0xff]
      %v414 = vld [vmem:[%s364 + $0xc9] sm:$0xff]
      %v415 = vld [vmem:[%s364 + $0xd9] sm:$0xff]
      %v416 = vld [vmem:[%s364 + $0xe1] sm:$0xff]
      %v417 = vld [vmem:[%s364 + $0xf1] sm:$0xff]
      %v418 = vld [vmem:[%s364 + $0xf9] sm:$0xff]
      %v419 = vld [vmem:[%s364 + $0x109] sm:$0xff]
      %v420 = vld [vmem:[%s364 + $0x111] sm:$0xff]
      %v421 = vld [vmem:[%s364 + $0x121] sm:$0xff]
      %v422 = vld [vmem:[%s364 + $0x129] sm:$0xff]
      %v423 = vld [vmem:[%s364 + $0x139] sm:$0xff]
      %v424 = vld [vmem:[%s364 + $0x141] sm:$0xff]
      %v425 = vld [vmem:[%s364 + $0x151] sm:$0xff]
      %v426 = vld [vmem:[%s364 + $0x159] sm:$0xff]
      %v427 = vld [vmem:[%s364 + $0x169] sm:$0xff]
      %v428 = vld [vmem:[%s364 + $0x171] sm:$0xff]
      %v429 = vld [vmem:[%s364 + $0x2] sm:$0xff]
      %v430 = vld [vmem:[%s364 + $0xa] sm:$0xff]
      %v431 = vld [vmem:[%s364 + $0x1a] sm:$0xff]
      %v432 = vld [vmem:[%s364 + $0x22] sm:$0xff]
      %v433 = vld [vmem:[%s364 + $0x32] sm:$0xff]
      %v434 = vld [vmem:[%s364 + $0x3a] sm:$0xff]
      %v435 = vld [vmem:[%s364 + $0x4a] sm:$0xff]
      %v436 = vld [vmem:[%s364 + $0x52] sm:$0xff]
      %v437 = vld [vmem:[%s364 + $0x62] sm:$0xff]
      %v438 = vld [vmem:[%s364 + $0x6a] sm:$0xff]
      %v439 = vld [vmem:[%s364 + $0x7a] sm:$0xff]
      %v440 = vld [vmem:[%s364 + $0x82] sm:$0xff]
      %v441 = vld [vmem:[%s364 + $0x92] sm:$0xff]
      %v442 = vld [vmem:[%s364 + $0x9a] sm:$0xff]
      %v443 = vld [vmem:[%s364 + $0xaa] sm:$0xff]
      %v444 = vld [vmem:[%s364 + $0xb2] sm:$0xff]
      %v445 = vld [vmem:[%s364 + $0xc2] sm:$0xff]
      %v446 = vld [vmem:[%s364 + $0xca] sm:$0xff]
      %v447 = vld [vmem:[%s364 + $0xda] sm:$0xff]
      %v448 = vld [vmem:[%s364 + $0xe2] sm:$0xff]
      %v449 = vld [vmem:[%s364 + $0xf2] sm:$0xff]
      %v450 = vld [vmem:[%s364 + $0xfa] sm:$0xff]
      %v451 = vld [vmem:[%s364 + $0x10a] sm:$0xff]
      %v452 = vld [vmem:[%s364 + $0x112] sm:$0xff]
      %v453 = vld [vmem:[%s364 + $0x122] sm:$0xff]
      %v454 = vld [vmem:[%s364 + $0x12a] sm:$0xff]
      %v455 = vld [vmem:[%s364 + $0x13a] sm:$0xff]
      %v456 = vld [vmem:[%s364 + $0x142] sm:$0xff]
      %v457 = vld [vmem:[%s364 + $0x152] sm:$0xff]
      %v458 = vld [vmem:[%s364 + $0x15a] sm:$0xff]
      %v459 = vld [vmem:[%s364 + $0x16a] sm:$0xff]
      %v460 = vld [vmem:[%s364 + $0x172] sm:$0xff]
      %493 = vrot.lane.b32.xlu0 %v203, 3
      %v494 = vpop.permute.xlu0 %493
      %495 = vrot.lane.b32.xlu0 %v204, 3
      %v496 = vpop.permute.xlu0 %495
      %497 = vrot.lane.b32.xlu0 %v205, 3
      %v498 = vpop.permute.xlu0 %497
      %499 = vrot.lane.b32.xlu0 %v206, 3
      %v500 = vpop.permute.xlu0 %499
      %501 = vrot.lane.b32.xlu0 %v207, 3
      %v502 = vpop.permute.xlu0 %501
      %503 = vrot.lane.b32.xlu0 %v208, 3
      %v504 = vpop.permute.xlu0 %503
      %505 = vrot.lane.b32.xlu0 %v209, 3
      %v506 = vpop.permute.xlu0 %505
      %507 = vrot.lane.b32.xlu0 %v210, 3
      %v508 = vpop.permute.xlu0 %507
      %509 = vrot.lane.b32.xlu0 %v211, 3
      %v510 = vpop.permute.xlu0 %509
      %511 = vrot.lane.b32.xlu0 %v212, 3
      %v512 = vpop.permute.xlu0 %511
      %513 = vrot.lane.b32.xlu0 %v213, 3
      %v514 = vpop.permute.xlu0 %513
      %515 = vrot.lane.b32.xlu0 %v214, 3
      %v516 = vpop.permute.xlu0 %515
      %517 = vrot.lane.b32.xlu0 %v215, 3
      %v518 = vpop.permute.xlu0 %517
      %519 = vrot.lane.b32.xlu0 %v216, 3
      %v520 = vpop.permute.xlu0 %519
      %521 = vrot.lane.b32.xlu0 %v217, 3
      %v522 = vpop.permute.xlu0 %521
      %523 = vrot.lane.b32.xlu0 %v218, 3
      %v524 = vpop.permute.xlu0 %523
      %525 = vrot.lane.b32.xlu0 %v219, 3
      %v526 = vpop.permute.xlu0 %525
      %527 = vrot.lane.b32.xlu0 %v220, 3
      %v528 = vpop.permute.xlu0 %527
      %529 = vrot.lane.b32.xlu0 %v221, 3
      %v530 = vpop.permute.xlu0 %529
      %531 = vrot.lane.b32.xlu0 %v222, 3
      %v532 = vpop.permute.xlu0 %531
      %533 = vrot.lane.b32.xlu0 %v223, 3
      %v534 = vpop.permute.xlu0 %533
      %535 = vrot.lane.b32.xlu0 %v224, 3
      %v536 = vpop.permute.xlu0 %535
      %537 = vrot.lane.b32.xlu0 %v225, 3
      %v538 = vpop.permute.xlu0 %537
      %539 = vrot.lane.b32.xlu0 %v226, 3
      %v540 = vpop.permute.xlu0 %539
      %541 = vrot.lane.b32.xlu0 %v227, 3
      %v542 = vpop.permute.xlu0 %541
      %543 = vrot.lane.b32.xlu0 %v228, 3
      %v544 = vpop.permute.xlu0 %543
      %545 = vrot.lane.b32.xlu0 %v229, 3
      %v546 = vpop.permute.xlu0 %545
      %547 = vrot.lane.b32.xlu0 %v230, 3
      %v548 = vpop.permute.xlu0 %547
      %549 = vrot.lane.b32.xlu0 %v231, 3
      %v550 = vpop.permute.xlu0 %549
      %551 = vrot.lane.b32.xlu0 %v232, 3
      %v552 = vpop.permute.xlu0 %551
      %553 = vrot.lane.b32.xlu0 %v233, 3
      %v554 = vpop.permute.xlu0 %553
      %555 = vrot.lane.b32.xlu0 %v234, 3
      %v556 = vpop.permute.xlu0 %555
      %621 = vrot.lane.b32.xlu0 %v235, 6
      %v622 = vpop.permute.xlu0 %621
      %623 = vrot.lane.b32.xlu0 %v236, 6
      %v624 = vpop.permute.xlu0 %623
      %625 = vrot.lane.b32.xlu0 %v237, 6
      %v626 = vpop.permute.xlu0 %625
      %627 = vrot.lane.b32.xlu0 %v238, 6
      %v628 = vpop.permute.xlu0 %627
      %629 = vrot.lane.b32.xlu0 %v239, 6
      %v630 = vpop.permute.xlu0 %629
      %631 = vrot.lane.b32.xlu0 %v240, 6
      %v632 = vpop.permute.xlu0 %631
      %633 = vrot.lane.b32.xlu0 %v241, 6
      %v634 = vpop.permute.xlu0 %633
      %635 = vrot.lane.b32.xlu0 %v242, 6
      %v636 = vpop.permute.xlu0 %635
      %637 = vrot.lane.b32.xlu0 %v243, 6
      %v638 = vpop.permute.xlu0 %637
      %639 = vrot.lane.b32.xlu0 %v244, 6
      %v640 = vpop.permute.xlu0 %639
      %641 = vrot.lane.b32.xlu0 %v245, 6
      %v642 = vpop.permute.xlu0 %641
      %643 = vrot.lane.b32.xlu0 %v246, 6
      %v644 = vpop.permute.xlu0 %643
      %645 = vrot.lane.b32.xlu0 %v247, 6
      %v646 = vpop.permute.xlu0 %645
      %647 = vrot.lane.b32.xlu0 %v248, 6
      %v648 = vpop.permute.xlu0 %647
      %649 = vrot.lane.b32.xlu0 %v249, 6
      %v650 = vpop.permute.xlu0 %649
      %651 = vrot.lane.b32.xlu0 %v250, 6
      %v652 = vpop.permute.xlu0 %651
      %653 = vrot.lane.b32.xlu0 %v251, 6
      %v654 = vpop.permute.xlu0 %653
      %655 = vrot.lane.b32.xlu0 %v252, 6
      %v656 = vpop.permute.xlu0 %655
      %657 = vrot.lane.b32.xlu0 %v253, 6
      %v658 = vpop.permute.xlu0 %657
      %659 = vrot.lane.b32.xlu0 %v254, 6
      %v660 = vpop.permute.xlu0 %659
      %661 = vrot.lane.b32.xlu0 %v255, 6
      %v662 = vpop.permute.xlu0 %661
      %663 = vrot.lane.b32.xlu0 %v256, 6
      %v664 = vpop.permute.xlu0 %663
      %665 = vrot.lane.b32.xlu0 %v257, 6
      %v666 = vpop.permute.xlu0 %665
      %667 = vrot.lane.b32.xlu0 %v258, 6
      %v668 = vpop.permute.xlu0 %667
      %669 = vrot.lane.b32.xlu0 %v259, 6
      %v670 = vpop.permute.xlu0 %669
      %671 = vrot.lane.b32.xlu0 %v260, 6
      %v672 = vpop.permute.xlu0 %671
      %673 = vrot.lane.b32.xlu0 %v261, 6
      %v674 = vpop.permute.xlu0 %673
      %675 = vrot.lane.b32.xlu0 %v262, 6
      %v676 = vpop.permute.xlu0 %675
      %677 = vrot.lane.b32.xlu0 %v263, 6
      %v678 = vpop.permute.xlu0 %677
      %679 = vrot.lane.b32.xlu0 %v264, 6
      %v680 = vpop.permute.xlu0 %679
      %681 = vrot.lane.b32.xlu0 %v265, 6
      %v682 = vpop.permute.xlu0 %681
      %683 = vrot.lane.b32.xlu0 %v266, 6
      %v684 = vpop.permute.xlu0 %683
      %749 = vrot.lane.b32.xlu0 %v268, 9
      %v750 = vpop.permute.xlu0 %749
      %751 = vrot.lane.b32.xlu0 %v269, 9
      %v752 = vpop.permute.xlu0 %751
      %753 = vrot.lane.b32.xlu0 %v270, 9
      %v754 = vpop.permute.xlu0 %753
      %755 = vrot.lane.b32.xlu0 %v271, 9
      %v756 = vpop.permute.xlu0 %755
      %757 = vrot.lane.b32.xlu0 %v272, 9
      %v758 = vpop.permute.xlu0 %757
      %759 = vrot.lane.b32.xlu0 %v273, 9
      %v760 = vpop.permute.xlu0 %759
      %761 = vrot.lane.b32.xlu0 %v274, 9
      %v762 = vpop.permute.xlu0 %761
      %763 = vrot.lane.b32.xlu0 %v275, 9
      %v764 = vpop.permute.xlu0 %763
      %765 = vrot.lane.b32.xlu0 %v276, 9
      %v766 = vpop.permute.xlu0 %765
      %767 = vrot.lane.b32.xlu0 %v277, 9
      %v768 = vpop.permute.xlu0 %767
      %769 = vrot.lane.b32.xlu0 %v278, 9
      %v770 = vpop.permute.xlu0 %769
      %771 = vrot.lane.b32.xlu0 %v279, 9
      %v772 = vpop.permute.xlu0 %771
      %773 = vrot.lane.b32.xlu0 %v280, 9
      %v774 = vpop.permute.xlu0 %773
      %775 = vrot.lane.b32.xlu0 %v281, 9
      %v776 = vpop.permute.xlu0 %775
      %777 = vrot.lane.b32.xlu0 %v282, 9
      %v778 = vpop.permute.xlu0 %777
      %779 = vrot.lane.b32.xlu0 %v283, 9
      %v780 = vpop.permute.xlu0 %779
      %781 = vrot.lane.b32.xlu0 %v284, 9
      %v782 = vpop.permute.xlu0 %781
      %783 = vrot.lane.b32.xlu0 %v285, 9
      %v784 = vpop.permute.xlu0 %783
      %785 = vrot.lane.b32.xlu0 %v286, 9
      %v786 = vpop.permute.xlu0 %785
      %787 = vrot.lane.b32.xlu0 %v287, 9
      %v788 = vpop.permute.xlu0 %787
      %789 = vrot.lane.b32.xlu0 %v288, 9
      %v790 = vpop.permute.xlu0 %789
      %791 = vrot.lane.b32.xlu0 %v289, 9
      %v792 = vpop.permute.xlu0 %791
      %793 = vrot.lane.b32.xlu0 %v290, 9
      %v794 = vpop.permute.xlu0 %793
      %795 = vrot.lane.b32.xlu0 %v291, 9
      %v796 = vpop.permute.xlu0 %795
      %797 = vrot.lane.b32.xlu0 %v292, 9
      %v798 = vpop.permute.xlu0 %797
      %799 = vrot.lane.b32.xlu0 %v293, 9
      %v800 = vpop.permute.xlu0 %799
      %801 = vrot.lane.b32.xlu0 %v294, 9
      %v802 = vpop.permute.xlu0 %801
      %803 = vrot.lane.b32.xlu0 %v295, 9
      %v804 = vpop.permute.xlu0 %803
      %805 = vrot.lane.b32.xlu0 %v296, 9
      %v806 = vpop.permute.xlu0 %805
      %807 = vrot.lane.b32.xlu0 %v297, 9
      %v808 = vpop.permute.xlu0 %807
      %809 = vrot.lane.b32.xlu0 %v298, 9
      %v810 = vpop.permute.xlu0 %809
      %811 = vrot.lane.b32.xlu0 %v299, 9
      %v812 = vpop.permute.xlu0 %811
      %877 = vrot.lane.b32.xlu0 %v300, 12
      %v878 = vpop.permute.xlu0 %877
      %879 = vrot.lane.b32.xlu0 %v301, 12
      %v880 = vpop.permute.xlu0 %879
      %881 = vrot.lane.b32.xlu0 %v302, 12
      %v882 = vpop.permute.xlu0 %881
      %883 = vrot.lane.b32.xlu0 %v303, 12
      %v884 = vpop.permute.xlu0 %883
      %885 = vrot.lane.b32.xlu0 %v304, 12
      %v886 = vpop.permute.xlu0 %885
      %887 = vrot.lane.b32.xlu0 %v305, 12
      %v888 = vpop.permute.xlu0 %887
      %889 = vrot.lane.b32.xlu0 %v306, 12
      %v890 = vpop.permute.xlu0 %889
      %891 = vrot.lane.b32.xlu0 %v307, 12
      %v892 = vpop.permute.xlu0 %891
      %893 = vrot.lane.b32.xlu0 %v308, 12
      %v894 = vpop.permute.xlu0 %893
      %895 = vrot.lane.b32.xlu0 %v309, 12
      %v896 = vpop.permute.xlu0 %895
      %897 = vrot.lane.b32.xlu0 %v310, 12
      %v898 = vpop.permute.xlu0 %897
      %899 = vrot.lane.b32.xlu0 %v311, 12
      %v900 = vpop.permute.xlu0 %899
      %901 = vrot.lane.b32.xlu0 %v312, 12
      %v902 = vpop.permute.xlu0 %901
      %903 = vrot.lane.b32.xlu0 %v313, 12
      %v904 = vpop.permute.xlu0 %903
      %905 = vrot.lane.b32.xlu0 %v314, 12
      %v906 = vpop.permute.xlu0 %905
      %907 = vrot.lane.b32.xlu0 %v315, 12
      %v908 = vpop.permute.xlu0 %907
      %909 = vrot.lane.b32.xlu0 %v316, 12
      %v910 = vpop.permute.xlu0 %909
      %911 = vrot.lane.b32.xlu0 %v317, 12
      %v912 = vpop.permute.xlu0 %911
      %913 = vrot.lane.b32.xlu0 %v318, 12
      %v914 = vpop.permute.xlu0 %913
      %915 = vrot.lane.b32.xlu0 %v319, 12
      %v916 = vpop.permute.xlu0 %915
      %917 = vrot.lane.b32.xlu0 %v320, 12
      %v918 = vpop.permute.xlu0 %917
      %919 = vrot.lane.b32.xlu0 %v321, 12
      %v920 = vpop.permute.xlu0 %919
      %921 = vrot.lane.b32.xlu0 %v322, 12
      %v922 = vpop.permute.xlu0 %921
      %923 = vrot.lane.b32.xlu0 %v323, 12
      %v924 = vpop.permute.xlu0 %923
      %925 = vrot.lane.b32.xlu0 %v324, 12
      %v926 = vpop.permute.xlu0 %925
      %927 = vrot.lane.b32.xlu0 %v325, 12
      %v928 = vpop.permute.xlu0 %927
      %929 = vrot.lane.b32.xlu0 %v326, 12
      %v930 = vpop.permute.xlu0 %929
      %931 = vrot.lane.b32.xlu0 %v327, 12
      %v932 = vpop.permute.xlu0 %931
      %933 = vrot.lane.b32.xlu0 %v328, 12
      %v934 = vpop.permute.xlu0 %933
      %935 = vrot.lane.b32.xlu0 %v329, 12
      %v936 = vpop.permute.xlu0 %935
      %937 = vrot.lane.b32.xlu0 %v330, 12
      %v938 = vpop.permute.xlu0 %937
      %939 = vrot.lane.b32.xlu0 %v331, 12
      %v940 = vpop.permute.xlu0 %939
      %1005 = vrot.lane.b32.xlu0 %v332, 15
      %v1006 = vpop.permute.xlu0 %1005
      %1007 = vrot.lane.b32.xlu0 %v333, 15
      %v1008 = vpop.permute.xlu0 %1007
      %1009 = vrot.lane.b32.xlu0 %v334, 15
      %v1010 = vpop.permute.xlu0 %1009
      %1011 = vrot.lane.b32.xlu0 %v335, 15
      %v1012 = vpop.permute.xlu0 %1011
      %1013 = vrot.lane.b32.xlu0 %v336, 15
      %v1014 = vpop.permute.xlu0 %1013
      %1015 = vrot.lane.b32.xlu0 %v337, 15
      %v1016 = vpop.permute.xlu0 %1015
      %1017 = vrot.lane.b32.xlu0 %v338, 15
      %v1018 = vpop.permute.xlu0 %1017
      %1019 = vrot.lane.b32.xlu0 %v339, 15
      %v1020 = vpop.permute.xlu0 %1019
      %1021 = vrot.lane.b32.xlu0 %v340, 15
      %v1022 = vpop.permute.xlu0 %1021
      %1023 = vrot.lane.b32.xlu0 %v341, 15
      %v1024 = vpop.permute.xlu0 %1023
      %1025 = vrot.lane.b32.xlu0 %v342, 15
      %v1026 = vpop.permute.xlu0 %1025
      %1027 = vrot.lane.b32.xlu0 %v343, 15
      %v1028 = vpop.permute.xlu0 %1027
      %1029 = vrot.lane.b32.xlu0 %v344, 15
      %v1030 = vpop.permute.xlu0 %1029
      %1031 = vrot.lane.b32.xlu0 %v345, 15
      %v1032 = vpop.permute.xlu0 %1031
      %1033 = vrot.lane.b32.xlu0 %v346, 15
      %v1034 = vpop.permute.xlu0 %1033
      %1035 = vrot.lane.b32.xlu0 %v347, 15
      %v1036 = vpop.permute.xlu0 %1035
      %1037 = vrot.lane.b32.xlu0 %v348, 15
      %v1038 = vpop.permute.xlu0 %1037
      %1039 = vrot.lane.b32.xlu0 %v349, 15
      %v1040 = vpop.permute.xlu0 %1039
      %1041 = vrot.lane.b32.xlu0 %v350, 15
      %v1042 = vpop.permute.xlu0 %1041
      %1043 = vrot.lane.b32.xlu0 %v351, 15
      %v1044 = vpop.permute.xlu0 %1043
      %1045 = vrot.lane.b32.xlu0 %v352, 15
      %v1046 = vpop.permute.xlu0 %1045
      %1047 = vrot.lane.b32.xlu0 %v353, 15
      %v1048 = vpop.permute.xlu0 %1047
      %1049 = vrot.lane.b32.xlu0 %v354, 15
      %v1050 = vpop.permute.xlu0 %1049
      %1051 = vrot.lane.b32.xlu0 %v355, 15
      %v1052 = vpop.permute.xlu0 %1051
      %1053 = vrot.lane.b32.xlu0 %v356, 15
      %v1054 = vpop.permute.xlu0 %1053
      %1055 = vrot.lane.b32.xlu0 %v357, 15
      %v1056 = vpop.permute.xlu0 %1055
      %1057 = vrot.lane.b32.xlu0 %v358, 15
      %v1058 = vpop.permute.xlu0 %1057
      %1059 = vrot.lane.b32.xlu0 %v359, 15
      %v1060 = vpop.permute.xlu0 %1059
      %1061 = vrot.lane.b32.xlu0 %v360, 15
      %v1062 = vpop.permute.xlu0 %1061
      %1063 = vrot.lane.b32.xlu0 %v361, 15
      %v1064 = vpop.permute.xlu0 %1063
      %1065 = vrot.lane.b32.xlu0 %v362, 15
      %v1066 = vpop.permute.xlu0 %1065
      %1067 = vrot.lane.b32.xlu0 %v363, 15
      %v1068 = vpop.permute.xlu0 %1067
      %1133 = vrot.lane.b32.xlu0 %v365, 18
      %v1134 = vpop.permute.xlu0 %1133
      %1135 = vrot.lane.b32.xlu0 %v366, 18
      %v1136 = vpop.permute.xlu0 %1135
      %1137 = vrot.lane.b32.xlu0 %v367, 18
      %v1138 = vpop.permute.xlu0 %1137
      %1139 = vrot.lane.b32.xlu0 %v368, 18
      %v1140 = vpop.permute.xlu0 %1139
      %1141 = vrot.lane.b32.xlu0 %v369, 18
      %v1142 = vpop.permute.xlu0 %1141
      %1143 = vrot.lane.b32.xlu0 %v370, 18
      %v1144 = vpop.permute.xlu0 %1143
      %1145 = vrot.lane.b32.xlu0 %v371, 18
      %v1146 = vpop.permute.xlu0 %1145
      %1147 = vrot.lane.b32.xlu0 %v372, 18
      %v1148 = vpop.permute.xlu0 %1147
      %1149 = vrot.lane.b32.xlu0 %v373, 18
      %v1150 = vpop.permute.xlu0 %1149
      %1151 = vrot.lane.b32.xlu0 %v374, 18
      %v1152 = vpop.permute.xlu0 %1151
      %1153 = vrot.lane.b32.xlu0 %v375, 18
      %v1154 = vpop.permute.xlu0 %1153
      %1155 = vrot.lane.b32.xlu0 %v376, 18
      %v1156 = vpop.permute.xlu0 %1155
      %1157 = vrot.lane.b32.xlu0 %v377, 18
      %v1158 = vpop.permute.xlu0 %1157
      %1159 = vrot.lane.b32.xlu0 %v378, 18
      %v1160 = vpop.permute.xlu0 %1159
      %1161 = vrot.lane.b32.xlu0 %v379, 18
      %v1162 = vpop.permute.xlu0 %1161
      %1163 = vrot.lane.b32.xlu0 %v380, 18
      %v1164 = vpop.permute.xlu0 %1163
      %1165 = vrot.lane.b32.xlu0 %v381, 18
      %v1166 = vpop.permute.xlu0 %1165
      %1167 = vrot.lane.b32.xlu0 %v382, 18
      %v1168 = vpop.permute.xlu0 %1167
      %1169 = vrot.lane.b32.xlu0 %v383, 18
      %v1170 = vpop.permute.xlu0 %1169
      %1171 = vrot.lane.b32.xlu0 %v384, 18
      %v1172 = vpop.permute.xlu0 %1171
      %1173 = vrot.lane.b32.xlu0 %v385, 18
      %v1174 = vpop.permute.xlu0 %1173
      %1175 = vrot.lane.b32.xlu0 %v386, 18
      %v1176 = vpop.permute.xlu0 %1175
      %1177 = vrot.lane.b32.xlu0 %v387, 18
      %v1178 = vpop.permute.xlu0 %1177
      %1179 = vrot.lane.b32.xlu0 %v388, 18
      %v1180 = vpop.permute.xlu0 %1179
      %1181 = vrot.lane.b32.xlu0 %v389, 18
      %v1182 = vpop.permute.xlu0 %1181
      %1183 = vrot.lane.b32.xlu0 %v390, 18
      %v1184 = vpop.permute.xlu0 %1183
      %1185 = vrot.lane.b32.xlu0 %v391, 18
      %v1186 = vpop.permute.xlu0 %1185
      %1187 = vrot.lane.b32.xlu0 %v392, 18
      %v1188 = vpop.permute.xlu0 %1187
      %1189 = vrot.lane.b32.xlu0 %v393, 18
      %v1190 = vpop.permute.xlu0 %1189
      %1191 = vrot.lane.b32.xlu0 %v394, 18
      %v1192 = vpop.permute.xlu0 %1191
      %1193 = vrot.lane.b32.xlu0 %v395, 18
      %v1194 = vpop.permute.xlu0 %1193
      %1195 = vrot.lane.b32.xlu0 %v396, 18
      %v1196 = vpop.permute.xlu0 %1195
      %1261 = vrot.lane.b32.xlu0 %v397, 21
      %v1262 = vpop.permute.xlu0 %1261
      %1263 = vrot.lane.b32.xlu0 %v398, 21
      %v1264 = vpop.permute.xlu0 %1263
      %1265 = vrot.lane.b32.xlu0 %v399, 21
      %v1266 = vpop.permute.xlu0 %1265
      %1267 = vrot.lane.b32.xlu0 %v400, 21
      %v1268 = vpop.permute.xlu0 %1267
      %1269 = vrot.lane.b32.xlu0 %v401, 21
      %v1270 = vpop.permute.xlu0 %1269
      %1271 = vrot.lane.b32.xlu0 %v402, 21
      %v1272 = vpop.permute.xlu0 %1271
      %1273 = vrot.lane.b32.xlu0 %v403, 21
      %v1274 = vpop.permute.xlu0 %1273
      %1275 = vrot.lane.b32.xlu0 %v404, 21
      %v1276 = vpop.permute.xlu0 %1275
      %1277 = vrot.lane.b32.xlu0 %v405, 21
      %v1278 = vpop.permute.xlu0 %1277
      %1279 = vrot.lane.b32.xlu0 %v406, 21
      %v1280 = vpop.permute.xlu0 %1279
      %1281 = vrot.lane.b32.xlu0 %v407, 21
      %v1282 = vpop.permute.xlu0 %1281
      %1283 = vrot.lane.b32.xlu0 %v408, 21
      %v1284 = vpop.permute.xlu0 %1283
      %1285 = vrot.lane.b32.xlu0 %v409, 21
      %v1286 = vpop.permute.xlu0 %1285
      %1287 = vrot.lane.b32.xlu0 %v410, 21
      %v1288 = vpop.permute.xlu0 %1287
      %1289 = vrot.lane.b32.xlu0 %v411, 21
      %v1290 = vpop.permute.xlu0 %1289
      %1291 = vrot.lane.b32.xlu0 %v412, 21
      %v1292 = vpop.permute.xlu0 %1291
      %1293 = vrot.lane.b32.xlu0 %v413, 21
      %v1294 = vpop.permute.xlu0 %1293
      %1295 = vrot.lane.b32.xlu0 %v414, 21
      %v1296 = vpop.permute.xlu0 %1295
      %1297 = vrot.lane.b32.xlu0 %v415, 21
      %v1298 = vpop.permute.xlu0 %1297
      %1299 = vrot.lane.b32.xlu0 %v416, 21
      %v1300 = vpop.permute.xlu0 %1299
      %1301 = vrot.lane.b32.xlu0 %v417, 21
      %v1302 = vpop.permute.xlu0 %1301
      %1303 = vrot.lane.b32.xlu0 %v418, 21
      %v1304 = vpop.permute.xlu0 %1303
      %1305 = vrot.lane.b32.xlu0 %v419, 21
      %v1306 = vpop.permute.xlu0 %1305
      %1307 = vrot.lane.b32.xlu0 %v420, 21
      %v1308 = vpop.permute.xlu0 %1307
      %1309 = vrot.lane.b32.xlu0 %v421, 21
      %v1310 = vpop.permute.xlu0 %1309
      %1311 = vrot.lane.b32.xlu0 %v422, 21
      %v1312 = vpop.permute.xlu0 %1311
      %1313 = vrot.lane.b32.xlu0 %v423, 21
      %v1314 = vpop.permute.xlu0 %1313
      %1315 = vrot.lane.b32.xlu0 %v424, 21
      %v1316 = vpop.permute.xlu0 %1315
      %1317 = vrot.lane.b32.xlu0 %v425, 21
      %v1318 = vpop.permute.xlu0 %1317
      %1319 = vrot.lane.b32.xlu0 %v426, 21
      %v1320 = vpop.permute.xlu0 %1319
      %1321 = vrot.lane.b32.xlu0 %v427, 21
      %v1322 = vpop.permute.xlu0 %1321
      %1323 = vrot.lane.b32.xlu0 %v428, 21
      %v1324 = vpop.permute.xlu0 %1323
      %1389 = vrot.lane.b32.xlu0 %v429, 24
      %v1390 = vpop.permute.xlu0 %1389
      %1391 = vrot.lane.b32.xlu0 %v430, 24
      %v1392 = vpop.permute.xlu0 %1391
      %1393 = vrot.lane.b32.xlu0 %v431, 24
      %v1394 = vpop.permute.xlu0 %1393
      %1395 = vrot.lane.b32.xlu0 %v432, 24
      %v1396 = vpop.permute.xlu0 %1395
      %1397 = vrot.lane.b32.xlu0 %v433, 24
      %v1398 = vpop.permute.xlu0 %1397
      %1399 = vrot.lane.b32.xlu0 %v434, 24
      %v1400 = vpop.permute.xlu0 %1399
      %1401 = vrot.lane.b32.xlu0 %v435, 24
      %v1402 = vpop.permute.xlu0 %1401
      %1403 = vrot.lane.b32.xlu0 %v436, 24
      %v1404 = vpop.permute.xlu0 %1403
      %1405 = vrot.lane.b32.xlu0 %v437, 24
      %v1406 = vpop.permute.xlu0 %1405
      %1407 = vrot.lane.b32.xlu0 %v438, 24
      %v1408 = vpop.permute.xlu0 %1407
      %1409 = vrot.lane.b32.xlu0 %v439, 24
      %v1410 = vpop.permute.xlu0 %1409
      %1411 = vrot.lane.b32.xlu0 %v440, 24
      %v1412 = vpop.permute.xlu0 %1411
      %1413 = vrot.lane.b32.xlu0 %v441, 24
      %v1414 = vpop.permute.xlu0 %1413
      %1415 = vrot.lane.b32.xlu0 %v442, 24
      %v1416 = vpop.permute.xlu0 %1415
      %1417 = vrot.lane.b32.xlu0 %v443, 24
      %v1418 = vpop.permute.xlu0 %1417
      %1419 = vrot.lane.b32.xlu0 %v444, 24
      %v1420 = vpop.permute.xlu0 %1419
      %1421 = vrot.lane.b32.xlu0 %v445, 24
      %v1422 = vpop.permute.xlu0 %1421
      %1423 = vrot.lane.b32.xlu0 %v446, 24
      %v1424 = vpop.permute.xlu0 %1423
      %1425 = vrot.lane.b32.xlu0 %v447, 24
      %v1426 = vpop.permute.xlu0 %1425
      %1427 = vrot.lane.b32.xlu0 %v448, 24
      %v1428 = vpop.permute.xlu0 %1427
      %1429 = vrot.lane.b32.xlu0 %v449, 24
      %v1430 = vpop.permute.xlu0 %1429
      %1431 = vrot.lane.b32.xlu0 %v450, 24
      %v1432 = vpop.permute.xlu0 %1431
      %1433 = vrot.lane.b32.xlu0 %v451, 24
      %v1434 = vpop.permute.xlu0 %1433
      %1435 = vrot.lane.b32.xlu0 %v452, 24
      %v1436 = vpop.permute.xlu0 %1435
      %1437 = vrot.lane.b32.xlu0 %v453, 24
      %v1438 = vpop.permute.xlu0 %1437
      %1439 = vrot.lane.b32.xlu0 %v454, 24
      %v1440 = vpop.permute.xlu0 %1439
      %1441 = vrot.lane.b32.xlu0 %v455, 24
      %v1442 = vpop.permute.xlu0 %1441
      %1443 = vrot.lane.b32.xlu0 %v456, 24
      %v1444 = vpop.permute.xlu0 %1443
      %1445 = vrot.lane.b32.xlu0 %v457, 24
      %v1446 = vpop.permute.xlu0 %1445
      %1447 = vrot.lane.b32.xlu0 %v458, 24
      %v1448 = vpop.permute.xlu0 %1447
      %1449 = vrot.lane.b32.xlu0 %v459, 24
      %v1450 = vpop.permute.xlu0 %1449
      %1451 = vrot.lane.b32.xlu0 %v460, 24
      %v1452 = vpop.permute.xlu0 %1451
      %vm1485 = vcmask 23552
      %v1486 = vsel %vm1485, %v171, %v494
      %v1487 = vsel %vm1485, %v172, %v496
      %v1488 = vsel %vm1485, %v173, %v498
      %v1489 = vsel %vm1485, %v174, %v500
      %v1490 = vsel %vm1485, %v175, %v502
      %v1491 = vsel %vm1485, %v176, %v504
      %v1492 = vsel %vm1485, %v177, %v506
      %v1493 = vsel %vm1485, %v178, %v508
      %v1494 = vsel %vm1485, %v179, %v510
      %v1495 = vsel %vm1485, %v180, %v512
      %v1496 = vsel %vm1485, %v181, %v514
      %v1497 = vsel %vm1485, %v182, %v516
      %v1498 = vsel %vm1485, %v183, %v518
      %v1499 = vsel %vm1485, %v184, %v520
      %v1500 = vsel %vm1485, %v185, %v522
      %v1501 = vsel %vm1485, %v186, %v524
      %v1502 = vsel %vm1485, %v187, %v526
      %v1503 = vsel %vm1485, %v188, %v528
      %v1504 = vsel %vm1485, %v189, %v530
      %v1505 = vsel %vm1485, %v190, %v532
      %v1506 = vsel %vm1485, %v191, %v534
      %v1507 = vsel %vm1485, %v192, %v536
      %v1508 = vsel %vm1485, %v193, %v538
      %v1509 = vsel %vm1485, %v194, %v540
      %v1510 = vsel %vm1485, %v195, %v542
      %v1511 = vsel %vm1485, %v196, %v544
      %v1512 = vsel %vm1485, %v197, %v546
      %v1513 = vsel %vm1485, %v198, %v548
      %v1514 = vsel %vm1485, %v199, %v550
      %v1515 = vsel %vm1485, %v200, %v552
      %v1516 = vsel %vm1485, %v201, %v554
      %v1517 = vsel %vm1485, %v202, %v556
      %vm1518 = vcmask 48128
      %v1519 = vsel %vm1518, %v1486, %v622
      %v1520 = vsel %vm1518, %v1487, %v624
      %v1521 = vsel %vm1518, %v1488, %v626
      %v1522 = vsel %vm1518, %v1489, %v628
      %v1523 = vsel %vm1518, %v1490, %v630
      %v1524 = vsel %vm1518, %v1491, %v632
      %v1525 = vsel %vm1518, %v1492, %v634
      %v1526 = vsel %vm1518, %v1493, %v636
      %v1527 = vsel %vm1518, %v1494, %v638
      %v1528 = vsel %vm1518, %v1495, %v640
      %v1529 = vsel %vm1518, %v1496, %v642
      %v1530 = vsel %vm1518, %v1497, %v644
      %v1531 = vsel %vm1518, %v1498, %v646
      %v1532 = vsel %vm1518, %v1499, %v648
      %v1533 = vsel %vm1518, %v1500, %v650
      %v1534 = vsel %vm1518, %v1501, %v652
      %v1535 = vsel %vm1518, %v1502, %v654
      %v1536 = vsel %vm1518, %v1503, %v656
      %v1537 = vsel %vm1518, %v1504, %v658
      %v1538 = vsel %vm1518, %v1505, %v660
      %v1539 = vsel %vm1518, %v1506, %v662
      %v1540 = vsel %vm1518, %v1507, %v664
      %v1541 = vsel %vm1518, %v1508, %v666
      %v1542 = vsel %vm1518, %v1509, %v668
      %v1543 = vsel %vm1518, %v1510, %v670
      %v1544 = vsel %vm1518, %v1511, %v672
      %v1545 = vsel %vm1518, %v1512, %v674
      %v1546 = vsel %vm1518, %v1513, %v676
      %v1547 = vsel %vm1518, %v1514, %v678
      %v1548 = vsel %vm1518, %v1515, %v680
      %v1549 = vsel %vm1518, %v1516, %v682
      %v1550 = vsel %vm1518, %v1517, %v684
      %vm1551 = vcmask 72704
      %v1552 = vsel %vm1551, %v1519, %v750
      %v1553 = vsel %vm1551, %v1520, %v752
      %v1554 = vsel %vm1551, %v1521, %v754
      %v1555 = vsel %vm1551, %v1522, %v756
      %v1556 = vsel %vm1551, %v1523, %v758
      %v1557 = vsel %vm1551, %v1524, %v760
      %v1558 = vsel %vm1551, %v1525, %v762
      %v1559 = vsel %vm1551, %v1526, %v764
      %v1560 = vsel %vm1551, %v1527, %v766
      %v1561 = vsel %vm1551, %v1528, %v768
      %v1562 = vsel %vm1551, %v1529, %v770
      %v1563 = vsel %vm1551, %v1530, %v772
      %v1564 = vsel %vm1551, %v1531, %v774
      %v1565 = vsel %vm1551, %v1532, %v776
      %v1566 = vsel %vm1551, %v1533, %v778
      %v1567 = vsel %vm1551, %v1534, %v780
      %v1568 = vsel %vm1551, %v1535, %v782
      %v1569 = vsel %vm1551, %v1536, %v784
      %v1570 = vsel %vm1551, %v1537, %v786
      %v1571 = vsel %vm1551, %v1538, %v788
      %v1572 = vsel %vm1551, %v1539, %v790
      %v1573 = vsel %vm1551, %v1540, %v792
      %v1574 = vsel %vm1551, %v1541, %v794
      %v1575 = vsel %vm1551, %v1542, %v796
      %v1576 = vsel %vm1551, %v1543, %v798
      %v1577 = vsel %vm1551, %v1544, %v800
      %v1578 = vsel %vm1551, %v1545, %v802
      %v1579 = vsel %vm1551, %v1546, %v804
      %v1580 = vsel %vm1551, %v1547, %v806
      %v1581 = vsel %vm1551, %v1548, %v808
      %v1582 = vsel %vm1551, %v1549, %v810
      %v1583 = vsel %vm1551, %v1550, %v812
      %vm1584 = vcmask 97280
      %v1585 = vsel %vm1584, %v1552, %v878
      %v1586 = vsel %vm1584, %v1553, %v880
      %v1587 = vsel %vm1584, %v1554, %v882
      %v1588 = vsel %vm1584, %v1555, %v884
      %v1589 = vsel %vm1584, %v1556, %v886
      %v1590 = vsel %vm1584, %v1557, %v888
      %v1591 = vsel %vm1584, %v1558, %v890
      %v1592 = vsel %vm1584, %v1559, %v892
      %v1593 = vsel %vm1584, %v1560, %v894
      %v1594 = vsel %vm1584, %v1561, %v896
      %v1595 = vsel %vm1584, %v1562, %v898
      %v1596 = vsel %vm1584, %v1563, %v900
      %v1597 = vsel %vm1584, %v1564, %v902
      %v1598 = vsel %vm1584, %v1565, %v904
      %v1599 = vsel %vm1584, %v1566, %v906
      %v1600 = vsel %vm1584, %v1567, %v908
      %v1601 = vsel %vm1584, %v1568, %v910
      %v1602 = vsel %vm1584, %v1569, %v912
      %v1603 = vsel %vm1584, %v1570, %v914
      %v1604 = vsel %vm1584, %v1571, %v916
      %v1605 = vsel %vm1584, %v1572, %v918
      %v1606 = vsel %vm1584, %v1573, %v920
      %v1607 = vsel %vm1584, %v1574, %v922
      %v1608 = vsel %vm1584, %v1575, %v924
      %v1609 = vsel %vm1584, %v1576, %v926
      %v1610 = vsel %vm1584, %v1577, %v928
      %v1611 = vsel %vm1584, %v1578, %v930
      %v1612 = vsel %vm1584, %v1579, %v932
      %v1613 = vsel %vm1584, %v1580, %v934
      %v1614 = vsel %vm1584, %v1581, %v936
      %v1615 = vsel %vm1584, %v1582, %v938
      %v1616 = vsel %vm1584, %v1583, %v940
      %vm1617 = vcmask 121856
      %v1618 = vsel %vm1617, %v1585, %v1006
      %v1619 = vsel %vm1617, %v1586, %v1008
      %v1620 = vsel %vm1617, %v1587, %v1010
      %v1621 = vsel %vm1617, %v1588, %v1012
      %v1622 = vsel %vm1617, %v1589, %v1014
      %v1623 = vsel %vm1617, %v1590, %v1016
      %v1624 = vsel %vm1617, %v1591, %v1018
      %v1625 = vsel %vm1617, %v1592, %v1020
      %v1626 = vsel %vm1617, %v1593, %v1022
      %v1627 = vsel %vm1617, %v1594, %v1024
      %v1628 = vsel %vm1617, %v1595, %v1026
      %v1629 = vsel %vm1617, %v1596, %v1028
      %v1630 = vsel %vm1617, %v1597, %v1030
      %v1631 = vsel %vm1617, %v1598, %v1032
      %v1632 = vsel %vm1617, %v1599, %v1034
      %v1633 = vsel %vm1617, %v1600, %v1036
      %v1634 = vsel %vm1617, %v1601, %v1038
      %v1635 = vsel %vm1617, %v1602, %v1040
      %v1636 = vsel %vm1617, %v1603, %v1042
      %v1637 = vsel %vm1617, %v1604, %v1044
      %v1638 = vsel %vm1617, %v1605, %v1046
      %v1639 = vsel %vm1617, %v1606, %v1048
      %v1640 = vsel %vm1617, %v1607, %v1050
      %v1641 = vsel %vm1617, %v1608, %v1052
      %v1642 = vsel %vm1617, %v1609, %v1054
      %v1643 = vsel %vm1617, %v1610, %v1056
      %v1644 = vsel %vm1617, %v1611, %v1058
      %v1645 = vsel %vm1617, %v1612, %v1060
      %v1646 = vsel %vm1617, %v1613, %v1062
      %v1647 = vsel %vm1617, %v1614, %v1064
      %v1648 = vsel %vm1617, %v1615, %v1066
      %v1649 = vsel %vm1617, %v1616, %v1068
      %vm1650 = vcmask 146432
      %v1651 = vsel %vm1650, %v1618, %v1134
      %v1652 = vsel %vm1650, %v1619, %v1136
      %v1653 = vsel %vm1650, %v1620, %v1138
      %v1654 = vsel %vm1650, %v1621, %v1140
      %v1655 = vsel %vm1650, %v1622, %v1142
      %v1656 = vsel %vm1650, %v1623, %v1144
      %v1657 = vsel %vm1650, %v1624, %v1146
      %v1658 = vsel %vm1650, %v1625, %v1148
      %v1659 = vsel %vm1650, %v1626, %v1150
      %v1660 = vsel %vm1650, %v1627, %v1152
      %v1661 = vsel %vm1650, %v1628, %v1154
      %v1662 = vsel %vm1650, %v1629, %v1156
      %v1663 = vsel %vm1650, %v1630, %v1158
      %v1664 = vsel %vm1650, %v1631, %v1160
      %v1665 = vsel %vm1650, %v1632, %v1162
      %v1666 = vsel %vm1650, %v1633, %v1164
      %v1667 = vsel %vm1650, %v1634, %v1166
      %v1668 = vsel %vm1650, %v1635, %v1168
      %v1669 = vsel %vm1650, %v1636, %v1170
      %v1670 = vsel %vm1650, %v1637, %v1172
      %v1671 = vsel %vm1650, %v1638, %v1174
      %v1672 = vsel %vm1650, %v1639, %v1176
      %v1673 = vsel %vm1650, %v1640, %v1178
      %v1674 = vsel %vm1650, %v1641, %v1180
      %v1675 = vsel %vm1650, %v1642, %v1182
      %v1676 = vsel %vm1650, %v1643, %v1184
      %v1677 = vsel %vm1650, %v1644, %v1186
      %v1678 = vsel %vm1650, %v1645, %v1188
      %v1679 = vsel %vm1650, %v1646, %v1190
      %v1680 = vsel %vm1650, %v1647, %v1192
      %v1681 = vsel %vm1650, %v1648, %v1194
      %v1682 = vsel %vm1650, %v1649, %v1196
      %vm1683 = vcmask 171008
      %v1684 = vsel %vm1683, %v1651, %v1262
      %v1685 = vsel %vm1683, %v1652, %v1264
      %v1686 = vsel %vm1683, %v1653, %v1266
      %v1687 = vsel %vm1683, %v1654, %v1268
      %v1688 = vsel %vm1683, %v1655, %v1270
      %v1689 = vsel %vm1683, %v1656, %v1272
      %v1690 = vsel %vm1683, %v1657, %v1274
      %v1691 = vsel %vm1683, %v1658, %v1276
      %v1692 = vsel %vm1683, %v1659, %v1278
      %v1693 = vsel %vm1683, %v1660, %v1280
      %v1694 = vsel %vm1683, %v1661, %v1282
      %v1695 = vsel %vm1683, %v1662, %v1284
      %v1696 = vsel %vm1683, %v1663, %v1286
      %v1697 = vsel %vm1683, %v1664, %v1288
      %v1698 = vsel %vm1683, %v1665, %v1290
      %v1699 = vsel %vm1683, %v1666, %v1292
      %v1700 = vsel %vm1683, %v1667, %v1294
      %v1701 = vsel %vm1683, %v1668, %v1296
      %v1702 = vsel %vm1683, %v1669, %v1298
      %v1703 = vsel %vm1683, %v1670, %v1300
      %v1704 = vsel %vm1683, %v1671, %v1302
      %v1705 = vsel %vm1683, %v1672, %v1304
      %v1706 = vsel %vm1683, %v1673, %v1306
      %v1707 = vsel %vm1683, %v1674, %v1308
      %v1708 = vsel %vm1683, %v1675, %v1310
      %v1709 = vsel %vm1683, %v1676, %v1312
      %v1710 = vsel %vm1683, %v1677, %v1314
      %v1711 = vsel %vm1683, %v1678, %v1316
      %v1712 = vsel %vm1683, %v1679, %v1318
      %v1713 = vsel %vm1683, %v1680, %v1320
      %v1714 = vsel %vm1683, %v1681, %v1322
      %v1715 = vsel %vm1683, %v1682, %v1324
      %vm1716 = vcmask 195584
      %v1717 = vsel %vm1716, %v1684, %v1390
      %v1718 = vsel %vm1716, %v1685, %v1392
      %v1719 = vsel %vm1716, %v1686, %v1394
      %v1720 = vsel %vm1716, %v1687, %v1396
      %v1721 = vsel %vm1716, %v1688, %v1398
      %v1722 = vsel %vm1716, %v1689, %v1400
      %v1723 = vsel %vm1716, %v1690, %v1402
      %v1724 = vsel %vm1716, %v1691, %v1404
      %v1725 = vsel %vm1716, %v1692, %v1406
      %v1726 = vsel %vm1716, %v1693, %v1408
      %v1727 = vsel %vm1716, %v1694, %v1410
      %v1728 = vsel %vm1716, %v1695, %v1412
      %v1729 = vsel %vm1716, %v1696, %v1414
      %v1730 = vsel %vm1716, %v1697, %v1416
      %v1731 = vsel %vm1716, %v1698, %v1418
      %v1732 = vsel %vm1716, %v1699, %v1420
      %v1733 = vsel %vm1716, %v1700, %v1422
      %v1734 = vsel %vm1716, %v1701, %v1424
      %v1735 = vsel %vm1716, %v1702, %v1426
      %v1736 = vsel %vm1716, %v1703, %v1428
      %v1737 = vsel %vm1716, %v1704, %v1430
      %v1738 = vsel %vm1716, %v1705, %v1432
      %v1739 = vsel %vm1716, %v1706, %v1434
      %v1740 = vsel %vm1716, %v1707, %v1436
      %v1741 = vsel %vm1716, %v1708, %v1438
      %v1742 = vsel %vm1716, %v1709, %v1440
      %v1743 = vsel %vm1716, %v1710, %v1442
      %v1744 = vsel %vm1716, %v1711, %v1444
      %v1745 = vsel %vm1716, %v1712, %v1446
      %v1746 = vsel %vm1716, %v1713, %v1448
      %v1747 = vsel %vm1716, %v1714, %v1450
      %v1748 = vsel %vm1716, %v1715, %v1452
      %v1749 = vld [vmem:[%s1] sm:$0xff]
      %v1750 = vld [vmem:[%s2] sm:$0xff]
      %1752 = vset.pattern.permute.xlu0 0
      %1753 = vperm.xlu0 %1752, %v1750
      %v1754 = vpop.permute.xlu0 %1753
      %vm1756 = vcmask 220160
      %v1758 = vsel %vm1756, %v1749, 0
      %v1761 = vsel %vm1756, %v1717, 0
      %v1764 = vsel %vm1756, %v1718, 0
      %v1767 = vsel %vm1756, %v1719, 0
      %v1770 = vsel %vm1756, %v1720, 0
      %v1773 = vsel %vm1756, %v1721, 0
      %v1776 = vsel %vm1756, %v1722, 0
      %v1779 = vsel %vm1756, %v1723, 0
      %v1782 = vsel %vm1756, %v1724, 0
      %v1785 = vsel %vm1756, %v1725, 0
      %v1788 = vsel %vm1756, %v1726, 0
      %v1791 = vsel %vm1756, %v1727, 0
      %v1794 = vsel %vm1756, %v1728, 0
      %v1797 = vsel %vm1756, %v1729, 0
      %v1800 = vsel %vm1756, %v1730, 0
      %v1803 = vsel %vm1756, %v1731, 0
      %v1806 = vsel %vm1756, %v1732, 0
      %v1809 = vsel %vm1756, %v1733, 0
      %v1812 = vsel %vm1756, %v1734, 0
      %v1815 = vsel %vm1756, %v1735, 0
      %v1818 = vsel %vm1756, %v1736, 0
      %v1821 = vsel %vm1756, %v1737, 0
      %v1824 = vsel %vm1756, %v1738, 0
      %v1827 = vsel %vm1756, %v1739, 0
      %v1830 = vsel %vm1756, %v1740, 0
      %v1833 = vsel %vm1756, %v1741, 0
      %v1836 = vsel %vm1756, %v1742, 0
      %v1839 = vsel %vm1756, %v1743, 0
      %v1842 = vsel %vm1756, %v1744, 0
      %v1845 = vsel %vm1756, %v1745, 0
      %v1848 = vsel %vm1756, %v1746, 0
      %v1851 = vsel %vm1756, %v1747, 0
      %v1854 = vsel %vm1756, %v1748, 0
      %1856 = vmatpush.xpose.msra.mxu0 %v1806
      %1857 = vmatpush.xpose.msra.mxu0 %v1803
      %1858 = vmatpush.xpose.msra.mxu0 %v1800
      %1859 = vmatpush.xpose.msra.mxu0 %v1797
      %1860 = vmatpush.xpose.msra.mxu0 %v1794
      %1861 = vmatpush.xpose.msra.mxu0 %v1791
      %1862 = vmatpush.xpose.msra.mxu0 %v1788
      %1863 = vmatpush.xpose.msra.mxu0 %v1785
      %1864 = vmatpush.xpose.msra.mxu0 %v1782
      %1865 = vmatpush.xpose.msra.mxu0 %v1779
      %1866 = vmatpush.xpose.msra.mxu0 %v1776
      %1867 = vmatpush.xpose.msra.mxu0 %v1773
      %1868 = vmatpush.xpose.msra.mxu0 %v1770
      %1869 = vmatpush.xpose.msra.mxu0 %v1767
      %1870 = vmatpush.xpose.msra.mxu0 %v1764
      %1871 = vmatpush.xpose.msra.mxu0 %v1761
      %1872 = vmatmul.f32.gmra.mxu0 %v1758
      %v1873 = vpop.f32.mrf.mxu0
      %v1874 = vadd.f32 %v1754, %v1873
      %1875 = vdwg.mxu0
      %1876 = vmatpush.xpose.msra.mxu0 %v1854
      %1877 = vmatpush.xpose.msra.mxu0 %v1851
      %1878 = vmatpush.xpose.msra.mxu0 %v1848
      %1879 = vmatpush.xpose.msra.mxu0 %v1845
      %1880 = vmatpush.xpose.msra.mxu0 %v1842
      %1881 = vmatpush.xpose.msra.mxu0 %v1839
      %1882 = vmatpush.xpose.msra.mxu0 %v1836
      %1883 = vmatpush.xpose.msra.mxu0 %v1833
      %1884 = vmatpush.xpose.msra.mxu0 %v1830
      %1885 = vmatpush.xpose.msra.mxu0 %v1827
      %1886 = vmatpush.xpose.msra.mxu0 %v1824
      %1887 = vmatpush.xpose.msra.mxu0 %v1821
      %1888 = vmatpush.xpose.msra.mxu0 %v1818
      %1889 = vmatpush.xpose.msra.mxu0 %v1815
      %1890 = vmatpush.xpose.msra.mxu0 %v1812
      %1891 = vmatpush.xpose.msra.mxu0 %v1809
      %1892 = vmatmul.f32.gmra.mxu0 %v1758
      %v1893 = vpop.f32.mrf.mxu0
      %v1894 = vadd.f32 %v1754, %v1893
      %1895 = vdwg.mxu0
      %v1896 = vmax.f32 %v1874, 0.0
      %v1897 = vmax.f32 %v1894, 0.0
      %1898 = vst [vmem:[%s170] sm:$0xff] %v1896
      %1899 = vst [vmem:[%s170 + $0x8] sm:$0xff] %v1897
      %p1900 = scmp.lt.s32.totalorder %s14, 1
      %s1901 = scalar_select %p1900, %s14, 1
      %s1902 = smul.addr %s1901, 2
      %s1903 = smul.addr %s1902, 8
      %s1904 = scalar_lea.vmem %s3, %s1903
      // Predicated region
      $region33: #{_model_forward_impl.1} parent=31 // pred_check
        %p1905 = pneg %p100
      $region34: #{_model_forward_impl.1} parent=31 // pred_check_branch
        %1907 = sbr.rel (%p1905) target = $region36
      $region35: #{_model_forward_impl.1} parent=31 // pred_region
        _
      $region36: #{_model_forward_impl.1} parent=31 // pred_fallthru
        _
    $region32: #{_model_forward_impl.1} parent=5 // pred_fallthru
      _
    %p1908 = scmp.le.s32.totalorder 2, %s9
    // Predicated region
    $region37: #{_model_forward_impl.1} parent=5 // pred_check
      %p1909 = pneg %p1908
    $region38: #{_model_forward_impl.1} parent=5 // pred_check_branch
      %1911 = sbr.rel (%p1909) target = $region40
    $region39: #{_model_forward_impl.1} parent=5 // pred_region
      %s1912 = ssub.s32 %s9, 2
      // Predicated region
      $region41: #{_model_forward_impl.1} parent=39 // pred_check
        %p1913 = pneg %p106
      $region42: #{_model_forward_impl.1} parent=39 // pred_check_branch
        %1915 = sbr.rel (%p1913) target = $region44
      $region43: #{_model_forward_impl.1} parent=39 // pred_region
        %p1916 = scmp.lt.s32.totalorder %s15, 1
        %s1917 = scalar_select %p1916, %s15, 1
        %s1918 = smul.addr %s1917, 2
        %s1919 = smul.addr %s1918, 8
        %s1920 = scalar_lea.vmem %s3, %s1919
      $region44: #{_model_forward_impl.1} parent=39 // pred_fallthru
        _
    $region40: #{_model_forward_impl.1} parent=5 // pred_fallthru
      _
  $region6: #{_model_forward_impl.1} parent=0 // loop_footer
    %s13 = sadd.s32 1, %s9
  $region7: #{_model_forward_impl.1} parent=0 // loop_footer_branch
    %8 = sbr.rel target = $region3
  $region8: #{_model_forward_impl.1} parent=0 // loop_exit
    _

</llo_original>
